<compile_context>
chip_gen: v7x
topology: tpu7x:2x2x1
jax: 0.10.0
libtpu: 0.0.40
codegen_flags: <defaults>
</compile_context>

<pallas_src>
import jax
import jax.numpy as jnp
from jax import lax
from jax.experimental import pallas as pl
from jax.experimental.pallas import tpu as pltpu


def _make_resblock_kernel(H, W, CIN, CH):
    L = W * CH

    def kernel(x_ref, sh_ref, a1_ref, b1_ref, a2_ref, b2_ref, a3_ref, b3_ref,
               res_ref, o_ref):
        # x_ref  : (1, H, W*CIN)      one image, lane = x_pix*CIN + ci
        # sh_ref : (3, H, H)          row-shift matrices (SAME padding in H)
        # a*_ref : (3, W*Cin_k, W*CH) block-banded tap matrices (padding in W)
        # b*_ref : (1, W*CH)          bias tiled over W
        # res_ref: (H, W*CH)          residual (input broadcast over channels)
        # o_ref  : (H, W*CH)          lane-dense output slab
        def conv3x3(v, a_ref, b_ref):
            acc = jnp.zeros((H, L), jnp.float32)
            for dy in range(3):
                shifted = jnp.dot(sh_ref[dy], v,
                                  preferred_element_type=jnp.float32)
                acc = acc + jnp.dot(shifted, a_ref[dy],
                                    preferred_element_type=jnp.float32)
            return acc + b_ref[...]

        y = conv3x3(x_ref[0], a1_ref, b1_ref)
        y = conv3x3(y, a2_ref, b2_ref)
        y = conv3x3(y, a3_ref, b3_ref)
        o_ref[...] = y + res_ref[...]

    return kernel


def _band_matrices(w_hwio, W):
    """(3,3,ci,co) HWIO conv weight -> (3, W*ci, W*co) per-dy banded matrices.

    A_dy[xi*ci + c_in, xo*co + c_out] = w[dy, xi-xo+1, c_in, c_out] when
    |xi - xo| <= 1 else 0: the dx taps and the zero SAME-padding along W are
    folded into the matmul contraction dimension.
    """
    _, _, ci, co = w_hwio.shape
    mats = []
    for dy in range(3):
        a = jnp.zeros((W * ci, W * co), jnp.float32)
        for dx in range(3):
            shift = jnp.eye(W, k=1 - dx, dtype=jnp.float32)
            a = a + jnp.kron(shift, w_hwio[dy, dx].astype(jnp.float32))
        mats.append(a)
    return jnp.stack(mats)


def resblock_forward(x_nchw, params):
    """x_nchw: (N, CIN, H, W) f32 -> (N, CH, H, W), matching PyTorch ResBlock."""
    w1, b1, w2, b2, w3, b3 = params          # w*: (3,3,ci,co) HWIO, b*: (co,)
    N, CIN, H, W = x_nchw.shape
    CH = w1.shape[-1]
    L = W * CH
    LIN = W * CIN

    x = x_nchw.astype(jnp.float32)
    x_nhwc = jnp.transpose(x, (0, 2, 3, 1))                  # (N, H, W, CIN)
    x_rows = x_nhwc.reshape(N, H, LIN)                       # lane = x*CIN + ci

    # Residual x + fx (PyTorch broadcasts the channel dim: CIN==1 or CIN==CH).
    if CIN == 1:
        res = jnp.repeat(x_nhwc.reshape(N, H, W), CH, axis=-1)
    elif CIN == CH:
        res = x_nhwc.reshape(N, H, L)
    else:
        raise ValueError("residual add requires CIN == 1 or CIN == CH")
    res = res.reshape(N * H, L)

    # Weight-only restructuring (independent of x; exact, pure layout/scatter).
    a1 = _band_matrices(w1, W)                               # (3, W*CIN, L)
    a2 = _band_matrices(w2, W)                               # (3, L, L)
    a3 = _band_matrices(w3, W)                               # (3, L, L)
    sh = jnp.stack([jnp.eye(H, k=dy - 1, dtype=jnp.float32)
                    for dy in range(3)])                     # (3, H, H)
    b1t = jnp.tile(b1.astype(jnp.float32), W).reshape(1, L)
    b2t = jnp.tile(b2.astype(jnp.float32), W).reshape(1, L)
    b3t = jnp.tile(b3.astype(jnp.float32), W).reshape(1, L)

    kernel = _make_resblock_kernel(H, W, CIN, CH)

    out_rows = pl.pallas_call(
        kernel,
        out_shape=jax.ShapeDtypeStruct((N * H, L), jnp.float32),
        grid_spec=pltpu.PrefetchScalarGridSpec(
            num_scalar_prefetch=0,
            grid=(N,),                    # one image per step; parallel on v7x
            in_specs=[
                pl.BlockSpec((1, H, LIN), lambda i: (i, 0, 0)),   # x rows
                pl.BlockSpec((3, H, H), lambda i: (0, 0, 0)),     # row shifts
                pl.BlockSpec((3, LIN, L), lambda i: (0, 0, 0)),   # conv1 taps
                pl.BlockSpec((1, L), lambda i: (0, 0)),           # bias1
                pl.BlockSpec((3, L, L), lambda i: (0, 0, 0)),     # conv2 taps
                pl.BlockSpec((1, L), lambda i: (0, 0)),           # bias2
                pl.BlockSpec((3, L, L), lambda i: (0, 0, 0)),     # conv3 taps
                pl.BlockSpec((1, L), lambda i: (0, 0)),           # bias3
                pl.BlockSpec((H, L), lambda i: (i, 0)),           # residual
            ],
            out_specs=pl.BlockSpec((H, L), lambda i: (i, 0)),     # lane-dense
        ),
        compiler_params=pltpu.CompilerParams(
            dimension_semantics=("parallel",)),
    )(x_rows, sh, a1, b1t, a2, b2t, a3, b3t, res)

    # (N*H, W*CH) -> (N, H, W, CH) -> NCHW (pure layout plumbing)
    return jnp.transpose(out_rows.reshape(N, H, W, CH), (0, 3, 1, 2))


def _conv_ref_nhwc(x, w, b):
    y = lax.conv_general_dilated(
        x, w, window_strides=(1, 1), padding="SAME",
        dimension_numbers=("NHWC", "HWIO", "NHWC"))
    return y + b


if __name__ == "__main__":
    N, CIN, CH, H, W = 2, 1, 16, 16, 16   # ResBlock defaults: in=1, out=16, k=3
    key = jax.random.PRNGKey(0)
    ks = jax.random.split(key, 7)
    x = jax.random.normal(ks[0], (N, CIN, H, W), jnp.float32)
    w1 = 0.2 * jax.random.normal(ks[1], (3, 3, CIN, CH), jnp.float32)
    b1 = 0.1 * jax.random.normal(ks[2], (CH,), jnp.float32)
    w2 = 0.2 * jax.random.normal(ks[3], (3, 3, CH, CH), jnp.float32)
    b2 = 0.1 * jax.random.normal(ks[4], (CH,), jnp.float32)
    w3 = 0.2 * jax.random.normal(ks[5], (3, 3, CH, CH), jnp.float32)
    b3 = 0.1 * jax.random.normal(ks[6], (CH,), jnp.float32)
    params = (w1, b1, w2, b2, w3, b3)

    out = jax.block_until_ready(resblock_forward(x, params))

    # pure-JAX reference: three SAME convs then residual broadcast add.
    x_nhwc = jnp.transpose(x, (0, 2, 3, 1))
    fx = _conv_ref_nhwc(
        _conv_ref_nhwc(_conv_ref_nhwc(x_nhwc, w1, b1), w2, b2), w3, b3)
    ref = jnp.transpose(x_nhwc + fx, (0, 3, 1, 2))

    assert out.shape == (N, CH, H, W)
    assert jnp.allclose(out, ref, atol=1e-4, rtol=1e-4), \
        float(jnp.max(jnp.abs(out - ref)))
    print("KERNEL_OK")
</pallas_src>

<mosaic_0001>
module attributes {stable_mosaic.version = 11 : i64} {
  func.func @kernel(%arg0: i32, %arg1: memref<1x16x16xf32, #tpu.memory_space<vmem>>, %arg2: memref<3x16x16xf32, #tpu.memory_space<vmem>>, %arg3: memref<3x16x256xf32, #tpu.memory_space<vmem>>, %arg4: memref<1x256xf32, #tpu.memory_space<vmem>>, %arg5: memref<3x256x256xf32, #tpu.memory_space<vmem>>, %arg6: memref<1x256xf32, #tpu.memory_space<vmem>>, %arg7: memref<3x256x256xf32, #tpu.memory_space<vmem>>, %arg8: memref<1x256xf32, #tpu.memory_space<vmem>>, %arg9: memref<16x256xf32, #tpu.memory_space<vmem>>, %arg10: memref<16x256xf32, #tpu.memory_space<vmem>>) attributes {dimension_semantics = [#tpu.dimension_semantics<parallel>], iteration_bounds = array<i64: 2>, scalar_prefetch = 0 : i64, scratch_operands = 0 : i64, tpu.core_type = #tpu.core_type<tc>, window_params = [{transform_indices = @transform_0, window_bounds = array<i64: 1, 16, 16>}, {pipeline_mode = #tpu.pipeline_mode<synchronous>, transform_indices = @transform_1, window_bounds = array<i64: 3, 16, 16>}, {pipeline_mode = #tpu.pipeline_mode<synchronous>, transform_indices = @transform_2, window_bounds = array<i64: 3, 16, 256>}, {pipeline_mode = #tpu.pipeline_mode<synchronous>, transform_indices = @transform_3, window_bounds = array<i64: 1, 256>}, {pipeline_mode = #tpu.pipeline_mode<synchronous>, transform_indices = @transform_4, window_bounds = array<i64: 3, 256, 256>}, {pipeline_mode = #tpu.pipeline_mode<synchronous>, transform_indices = @transform_5, window_bounds = array<i64: 1, 256>}, {pipeline_mode = #tpu.pipeline_mode<synchronous>, transform_indices = @transform_6, window_bounds = array<i64: 3, 256, 256>}, {pipeline_mode = #tpu.pipeline_mode<synchronous>, transform_indices = @transform_7, window_bounds = array<i64: 1, 256>}, {transform_indices = @transform_8, window_bounds = array<i64: 16, 256>}, {transform_indices = @transform_9, window_bounds = array<i64: 16, 256>}]} {
    %c0 = arith.constant 0 : index
    %c0_0 = arith.constant 0 : index
    %c0_1 = arith.constant 0 : index
    %0 = vector.load %arg1[%c0, %c0_0, %c0_1] : memref<1x16x16xf32, #tpu.memory_space<vmem>>, vector<1x16x16xf32>
    %1 = vector.shape_cast %0 : vector<1x16x16xf32> to vector<16x16xf32>
    %cst = arith.constant 0.000000e+00 : f32
    %2 = vector.broadcast %cst : f32 to vector<16x256xf32>
    %c0_2 = arith.constant 0 : index
    %c0_3 = arith.constant 0 : index
    %c0_4 = arith.constant 0 : index
    %3 = vector.load %arg2[%c0_2, %c0_3, %c0_4] : memref<3x16x16xf32, #tpu.memory_space<vmem>>, vector<1x16x16xf32>
    %4 = vector.shape_cast %3 : vector<1x16x16xf32> to vector<16x16xf32>
    %cst_5 = arith.constant dense<0.000000e+00> : vector<16x16xf32>
    %5 = tpu.matmul %4, %1, %cst_5 {dimension_numbers = #tpu.dot_dimension_numbers<[1], [0], [0], [1], [0, 0, 1, 1], [], []>} : vector<16x16xf32>, vector<16x16xf32>, vector<16x16xf32> -> vector<16x16xf32>
    %c0_6 = arith.constant 0 : index
    %c0_7 = arith.constant 0 : index
    %c0_8 = arith.constant 0 : index
    %6 = vector.load %arg3[%c0_6, %c0_7, %c0_8] : memref<3x16x256xf32, #tpu.memory_space<vmem>>, vector<1x16x256xf32>
    %7 = vector.shape_cast %6 : vector<1x16x256xf32> to vector<16x256xf32>
    %cst_9 = arith.constant dense<0.000000e+00> : vector<16x256xf32>
    %8 = tpu.matmul %5, %7, %cst_9 {dimension_numbers = #tpu.dot_dimension_numbers<[1], [0], [0], [1], [0, 0, 1, 1], [], []>} : vector<16x16xf32>, vector<16x256xf32>, vector<16x256xf32> -> vector<16x256xf32>
    %9 = arith.addf %2, %8 : vector<16x256xf32>
    %c1 = arith.constant 1 : index
    %c0_10 = arith.constant 0 : index
    %c0_11 = arith.constant 0 : index
    %10 = vector.load %arg2[%c1, %c0_10, %c0_11] : memref<3x16x16xf32, #tpu.memory_space<vmem>>, vector<1x16x16xf32>
    %11 = vector.shape_cast %10 : vector<1x16x16xf32> to vector<16x16xf32>
    %cst_12 = arith.constant dense<0.000000e+00> : vector<16x16xf32>
    %12 = tpu.matmul %11, %1, %cst_12 {dimension_numbers = #tpu.dot_dimension_numbers<[1], [0], [0], [1], [0, 0, 1, 1], [], []>} : vector<16x16xf32>, vector<16x16xf32>, vector<16x16xf32> -> vector<16x16xf32>
    %c1_13 = arith.constant 1 : index
    %c0_14 = arith.constant 0 : index
    %c0_15 = arith.constant 0 : index
    %13 = vector.load %arg3[%c1_13, %c0_14, %c0_15] : memref<3x16x256xf32, #tpu.memory_space<vmem>>, vector<1x16x256xf32>
    %14 = vector.shape_cast %13 : vector<1x16x256xf32> to vector<16x256xf32>
    %cst_16 = arith.constant dense<0.000000e+00> : vector<16x256xf32>
    %15 = tpu.matmul %12, %14, %cst_16 {dimension_numbers = #tpu.dot_dimension_numbers<[1], [0], [0], [1], [0, 0, 1, 1], [], []>} : vector<16x16xf32>, vector<16x256xf32>, vector<16x256xf32> -> vector<16x256xf32>
    %16 = arith.addf %9, %15 : vector<16x256xf32>
    %c2 = arith.constant 2 : index
    %c0_17 = arith.constant 0 : index
    %c0_18 = arith.constant 0 : index
    %17 = vector.load %arg2[%c2, %c0_17, %c0_18] : memref<3x16x16xf32, #tpu.memory_space<vmem>>, vector<1x16x16xf32>
    %18 = vector.shape_cast %17 : vector<1x16x16xf32> to vector<16x16xf32>
    %cst_19 = arith.constant dense<0.000000e+00> : vector<16x16xf32>
    %19 = tpu.matmul %18, %1, %cst_19 {dimension_numbers = #tpu.dot_dimension_numbers<[1], [0], [0], [1], [0, 0, 1, 1], [], []>} : vector<16x16xf32>, vector<16x16xf32>, vector<16x16xf32> -> vector<16x16xf32>
    %c2_20 = arith.constant 2 : index
    %c0_21 = arith.constant 0 : index
    %c0_22 = arith.constant 0 : index
    %20 = vector.load %arg3[%c2_20, %c0_21, %c0_22] : memref<3x16x256xf32, #tpu.memory_space<vmem>>, vector<1x16x256xf32>
    %21 = vector.shape_cast %20 : vector<1x16x256xf32> to vector<16x256xf32>
    %cst_23 = arith.constant dense<0.000000e+00> : vector<16x256xf32>
    %22 = tpu.matmul %19, %21, %cst_23 {dimension_numbers = #tpu.dot_dimension_numbers<[1], [0], [0], [1], [0, 0, 1, 1], [], []>} : vector<16x16xf32>, vector<16x256xf32>, vector<16x256xf32> -> vector<16x256xf32>
    %23 = arith.addf %16, %22 : vector<16x256xf32>
    %c0_24 = arith.constant 0 : index
    %c0_25 = arith.constant 0 : index
    %24 = vector.load %arg4[%c0_24, %c0_25] : memref<1x256xf32, #tpu.memory_space<vmem>>, vector<1x256xf32>
    %25 = vector.broadcast %24 : vector<1x256xf32> to vector<16x256xf32>
    %26 = arith.addf %23, %25 : vector<16x256xf32>
    %cst_26 = arith.constant 0.000000e+00 : f32
    %27 = vector.broadcast %cst_26 : f32 to vector<16x256xf32>
    %c0_27 = arith.constant 0 : index
    %c0_28 = arith.constant 0 : index
    %c0_29 = arith.constant 0 : index
    %28 = vector.load %arg2[%c0_27, %c0_28, %c0_29] : memref<3x16x16xf32, #tpu.memory_space<vmem>>, vector<1x16x16xf32>
    %29 = vector.shape_cast %28 : vector<1x16x16xf32> to vector<16x16xf32>
    %cst_30 = arith.constant dense<0.000000e+00> : vector<16x256xf32>
    %30 = tpu.matmul %29, %26, %cst_30 {dimension_numbers = #tpu.dot_dimension_numbers<[1], [0], [0], [1], [0, 0, 1, 1], [], []>} : vector<16x16xf32>, vector<16x256xf32>, vector<16x256xf32> -> vector<16x256xf32>
    %c0_31 = arith.constant 0 : index
    %c0_32 = arith.constant 0 : index
    %c0_33 = arith.constant 0 : index
    %31 = vector.load %arg5[%c0_31, %c0_32, %c0_33] : memref<3x256x256xf32, #tpu.memory_space<vmem>>, vector<1x256x256xf32>
    %32 = vector.shape_cast %31 : vector<1x256x256xf32> to vector<256x256xf32>
    %cst_34 = arith.constant dense<0.000000e+00> : vector<16x256xf32>
    %33 = tpu.matmul %30, %32, %cst_34 {dimension_numbers = #tpu.dot_dimension_numbers<[1], [0], [0], [1], [0, 0, 1, 1], [], []>} : vector<16x256xf32>, vector<256x256xf32>, vector<16x256xf32> -> vector<16x256xf32>
    %34 = arith.addf %27, %33 : vector<16x256xf32>
    %c1_35 = arith.constant 1 : index
    %c0_36 = arith.constant 0 : index
    %c0_37 = arith.constant 0 : index
    %35 = vector.load %arg2[%c1_35, %c0_36, %c0_37] : memref<3x16x16xf32, #tpu.memory_space<vmem>>, vector<1x16x16xf32>
    %36 = vector.shape_cast %35 : vector<1x16x16xf32> to vector<16x16xf32>
    %cst_38 = arith.constant dense<0.000000e+00> : vector<16x256xf32>
    %37 = tpu.matmul %36, %26, %cst_38 {dimension_numbers = #tpu.dot_dimension_numbers<[1], [0], [0], [1], [0, 0, 1, 1], [], []>} : vector<16x16xf32>, vector<16x256xf32>, vector<16x256xf32> -> vector<16x256xf32>
    %c1_39 = arith.constant 1 : index
    %c0_40 = arith.constant 0 : index
    %c0_41 = arith.constant 0 : index
    %38 = vector.load %arg5[%c1_39, %c0_40, %c0_41] : memref<3x256x256xf32, #tpu.memory_space<vmem>>, vector<1x256x256xf32>
    %39 = vector.shape_cast %38 : vector<1x256x256xf32> to vector<256x256xf32>
    %cst_42 = arith.constant dense<0.000000e+00> : vector<16x256xf32>
    %40 = tpu.matmul %37, %39, %cst_42 {dimension_numbers = #tpu.dot_dimension_numbers<[1], [0], [0], [1], [0, 0, 1, 1], [], []>} : vector<16x256xf32>, vector<256x256xf32>, vector<16x256xf32> -> vector<16x256xf32>
    %41 = arith.addf %34, %40 : vector<16x256xf32>
    %c2_43 = arith.constant 2 : index
    %c0_44 = arith.constant 0 : index
    %c0_45 = arith.constant 0 : index
    %42 = vector.load %arg2[%c2_43, %c0_44, %c0_45] : memref<3x16x16xf32, #tpu.memory_space<vmem>>, vector<1x16x16xf32>
    %43 = vector.shape_cast %42 : vector<1x16x16xf32> to vector<16x16xf32>
    %cst_46 = arith.constant dense<0.000000e+00> : vector<16x256xf32>
    %44 = tpu.matmul %43, %26, %cst_46 {dimension_numbers = #tpu.dot_dimension_numbers<[1], [0], [0], [1], [0, 0, 1, 1], [], []>} : vector<16x16xf32>, vector<16x256xf32>, vector<16x256xf32> -> vector<16x256xf32>
    %c2_47 = arith.constant 2 : index
    %c0_48 = arith.constant 0 : index
    %c0_49 = arith.constant 0 : index
    %45 = vector.load %arg5[%c2_47, %c0_48, %c0_49] : memref<3x256x256xf32, #tpu.memory_space<vmem>>, vector<1x256x256xf32>
    %46 = vector.shape_cast %45 : vector<1x256x256xf32> to vector<256x256xf32>
    %cst_50 = arith.constant dense<0.000000e+00> : vector<16x256xf32>
    %47 = tpu.matmul %44, %46, %cst_50 {dimension_numbers = #tpu.dot_dimension_numbers<[1], [0], [0], [1], [0, 0, 1, 1], [], []>} : vector<16x256xf32>, vector<256x256xf32>, vector<16x256xf32> -> vector<16x256xf32>
    %48 = arith.addf %41, %47 : vector<16x256xf32>
    %c0_51 = arith.constant 0 : index
    %c0_52 = arith.constant 0 : index
    %49 = vector.load %arg6[%c0_51, %c0_52] : memref<1x256xf32, #tpu.memory_space<vmem>>, vector<1x256xf32>
    %50 = vector.broadcast %49 : vector<1x256xf32> to vector<16x256xf32>
    %51 = arith.addf %48, %50 : vector<16x256xf32>
    %cst_53 = arith.constant 0.000000e+00 : f32
    %52 = vector.broadcast %cst_53 : f32 to vector<16x256xf32>
    %c0_54 = arith.constant 0 : index
    %c0_55 = arith.constant 0 : index
    %c0_56 = arith.constant 0 : index
    %53 = vector.load %arg2[%c0_54, %c0_55, %c0_56] : memref<3x16x16xf32, #tpu.memory_space<vmem>>, vector<1x16x16xf32>
    %54 = vector.shape_cast %53 : vector<1x16x16xf32> to vector<16x16xf32>
    %cst_57 = arith.constant dense<0.000000e+00> : vector<16x256xf32>
    %55 = tpu.matmul %54, %51, %cst_57 {dimension_numbers = #tpu.dot_dimension_numbers<[1], [0], [0], [1], [0, 0, 1, 1], [], []>} : vector<16x16xf32>, vector<16x256xf32>, vector<16x256xf32> -> vector<16x256xf32>
    %c0_58 = arith.constant 0 : index
    %c0_59 = arith.constant 0 : index
    %c0_60 = arith.constant 0 : index
    %56 = vector.load %arg7[%c0_58, %c0_59, %c0_60] : memref<3x256x256xf32, #tpu.memory_space<vmem>>, vector<1x256x256xf32>
    %57 = vector.shape_cast %56 : vector<1x256x256xf32> to vector<256x256xf32>
    %cst_61 = arith.constant dense<0.000000e+00> : vector<16x256xf32>
    %58 = tpu.matmul %55, %57, %cst_61 {dimension_numbers = #tpu.dot_dimension_numbers<[1], [0], [0], [1], [0, 0, 1, 1], [], []>} : vector<16x256xf32>, vector<256x256xf32>, vector<16x256xf32> -> vector<16x256xf32>
    %59 = arith.addf %52, %58 : vector<16x256xf32>
    %c1_62 = arith.constant 1 : index
    %c0_63 = arith.constant 0 : index
    %c0_64 = arith.constant 0 : index
    %60 = vector.load %arg2[%c1_62, %c0_63, %c0_64] : memref<3x16x16xf32, #tpu.memory_space<vmem>>, vector<1x16x16xf32>
    %61 = vector.shape_cast %60 : vector<1x16x16xf32> to vector<16x16xf32>
    %cst_65 = arith.constant dense<0.000000e+00> : vector<16x256xf32>
    %62 = tpu.matmul %61, %51, %cst_65 {dimension_numbers = #tpu.dot_dimension_numbers<[1], [0], [0], [1], [0, 0, 1, 1], [], []>} : vector<16x16xf32>, vector<16x256xf32>, vector<16x256xf32> -> vector<16x256xf32>
    %c1_66 = arith.constant 1 : index
    %c0_67 = arith.constant 0 : index
    %c0_68 = arith.constant 0 : index
    %63 = vector.load %arg7[%c1_66, %c0_67, %c0_68] : memref<3x256x256xf32, #tpu.memory_space<vmem>>, vector<1x256x256xf32>
    %64 = vector.shape_cast %63 : vector<1x256x256xf32> to vector<256x256xf32>
    %cst_69 = arith.constant dense<0.000000e+00> : vector<16x256xf32>
    %65 = tpu.matmul %62, %64, %cst_69 {dimension_numbers = #tpu.dot_dimension_numbers<[1], [0], [0], [1], [0, 0, 1, 1], [], []>} : vector<16x256xf32>, vector<256x256xf32>, vector<16x256xf32> -> vector<16x256xf32>
    %66 = arith.addf %59, %65 : vector<16x256xf32>
    %c2_70 = arith.constant 2 : index
    %c0_71 = arith.constant 0 : index
    %c0_72 = arith.constant 0 : index
    %67 = vector.load %arg2[%c2_70, %c0_71, %c0_72] : memref<3x16x16xf32, #tpu.memory_space<vmem>>, vector<1x16x16xf32>
    %68 = vector.shape_cast %67 : vector<1x16x16xf32> to vector<16x16xf32>
    %cst_73 = arith.constant dense<0.000000e+00> : vector<16x256xf32>
    %69 = tpu.matmul %68, %51, %cst_73 {dimension_numbers = #tpu.dot_dimension_numbers<[1], [0], [0], [1], [0, 0, 1, 1], [], []>} : vector<16x16xf32>, vector<16x256xf32>, vector<16x256xf32> -> vector<16x256xf32>
    %c2_74 = arith.constant 2 : index
    %c0_75 = arith.constant 0 : index
    %c0_76 = arith.constant 0 : index
    %70 = vector.load %arg7[%c2_74, %c0_75, %c0_76] : memref<3x256x256xf32, #tpu.memory_space<vmem>>, vector<1x256x256xf32>
    %71 = vector.shape_cast %70 : vector<1x256x256xf32> to vector<256x256xf32>
    %cst_77 = arith.constant dense<0.000000e+00> : vector<16x256xf32>
    %72 = tpu.matmul %69, %71, %cst_77 {dimension_numbers = #tpu.dot_dimension_numbers<[1], [0], [0], [1], [0, 0, 1, 1], [], []>} : vector<16x256xf32>, vector<256x256xf32>, vector<16x256xf32> -> vector<16x256xf32>
    %73 = arith.addf %66, %72 : vector<16x256xf32>
    %c0_78 = arith.constant 0 : index
    %c0_79 = arith.constant 0 : index
    %74 = vector.load %arg8[%c0_78, %c0_79] : memref<1x256xf32, #tpu.memory_space<vmem>>, vector<1x256xf32>
    %75 = vector.broadcast %74 : vector<1x256xf32> to vector<16x256xf32>
    %76 = arith.addf %73, %75 : vector<16x256xf32>
    %c0_80 = arith.constant 0 : index
    %c0_81 = arith.constant 0 : index
    %77 = vector.load %arg9[%c0_80, %c0_81] : memref<16x256xf32, #tpu.memory_space<vmem>>, vector<16x256xf32>
    %78 = arith.addf %76, %77 : vector<16x256xf32>
    %c0_82 = arith.constant 0 : index
    %c0_83 = arith.constant 0 : index
    %79 = vector.load %arg10[%c0_82, %c0_83] : memref<16x256xf32, #tpu.memory_space<vmem>>, vector<16x256xf32>
    tpu.vector_store %arg10[%c0_82, %c0_83], %78 {strides = array<i32>} : memref<16x256xf32, #tpu.memory_space<vmem>>, vector<16x256xf32>,
    return
  }
  func.func @transform_0(%arg0: i32) -> (i32, i32, i32) {
    %c0_i32 = arith.constant 0 : i32
    %c0_i32_0 = arith.constant 0 : i32
    %c0_i32_1 = arith.constant 0 : i32
    return %arg0, %c0_i32, %c0_i32_0 : i32, i32, i32
  }
  func.func @transform_1(%arg0: i32) -> (i32, i32, i32) {
    %c0_i32 = arith.constant 0 : i32
    %c0_i32_0 = arith.constant 0 : i32
    %c0_i32_1 = arith.constant 0 : i32
    %c0_i32_2 = arith.constant 0 : i32
    return %c0_i32, %c0_i32_0, %c0_i32_1 : i32, i32, i32
  }
  func.func @transform_2(%arg0: i32) -> (i32, i32, i32) {
    %c0_i32 = arith.constant 0 : i32
    %c0_i32_0 = arith.constant 0 : i32
    %c0_i32_1 = arith.constant 0 : i32
    %c0_i32_2 = arith.constant 0 : i32
    return %c0_i32, %c0_i32_0, %c0_i32_1 : i32, i32, i32
  }
  func.func @transform_3(%arg0: i32) -> (i32, i32) {
    %c0_i32 = arith.constant 0 : i32
    %c0_i32_0 = arith.constant 0 : i32
    %c0_i32_1 = arith.constant 0 : i32
    return %c0_i32, %c0_i32_0 : i32, i32
  }
  func.func @transform_4(%arg0: i32) -> (i32, i32, i32) {
    %c0_i32 = arith.constant 0 : i32
    %c0_i32_0 = arith.constant 0 : i32
    %c0_i32_1 = arith.constant 0 : i32
    %c0_i32_2 = arith.constant 0 : i32
    return %c0_i32, %c0_i32_0, %c0_i32_1 : i32, i32, i32
  }
  func.func @transform_5(%arg0: i32) -> (i32, i32) {
    %c0_i32 = arith.constant 0 : i32
    %c0_i32_0 = arith.constant 0 : i32
    %c0_i32_1 = arith.constant 0 : i32
    return %c0_i32, %c0_i32_0 : i32, i32
  }
  func.func @transform_6(%arg0: i32) -> (i32, i32, i32) {
    %c0_i32 = arith.constant 0 : i32
    %c0_i32_0 = arith.constant 0 : i32
    %c0_i32_1 = arith.constant 0 : i32
    %c0_i32_2 = arith.constant 0 : i32
    return %c0_i32, %c0_i32_0, %c0_i32_1 : i32, i32, i32
  }
  func.func @transform_7(%arg0: i32) -> (i32, i32) {
    %c0_i32 = arith.constant 0 : i32
    %c0_i32_0 = arith.constant 0 : i32
    %c0_i32_1 = arith.constant 0 : i32
    return %c0_i32, %c0_i32_0 : i32, i32
  }
  func.func @transform_8(%arg0: i32) -> (i32, i32) {
    %c0_i32 = arith.constant 0 : i32
    %c0_i32_0 = arith.constant 0 : i32
    return %arg0, %c0_i32 : i32, i32
  }
  func.func @transform_9(%arg0: i32) -> (i32, i32) {
    %c0_i32 = arith.constant 0 : i32
    %c0_i32_0 = arith.constant 0 : i32
    return %arg0, %c0_i32 : i32, i32
  }
}

</mosaic_0001>

<llo_original>
// kernel: tpu_custom_call.1
$region0: #{tpu_custom_call.1}
  #allocation0 [shape = 'u32[]', space=smem, size = 0x4, offset = 0x4, fixed_abs, tag = 'smem constant byte address 0x4 - core index']
  #allocation1 [shape = 'u32[144,128]{1,0:T(1,128)}', space=vmem, size = 0x12000, scoped, tag = 'internal scratch']
  %s0 = inlined_call_operand.hbm [shape: f32[2,16,16], index: 0, kind: input, shape index: {}]
  %s1 = inlined_call_operand.hbm [shape: f32[3,16,16], index: 1, kind: input, shape index: {}]
  %s2 = inlined_call_operand.hbm [shape: f32[3,16,256], index: 2, kind: input, shape index: {}]
  %s3 = inlined_call_operand.vmem [shape: f32[1,256], index: 3, kind: input, shape index: {}]
  %s4 = inlined_call_operand.hbm [shape: f32[3,256,256], index: 4, kind: input, shape index: {}]
  %s5 = inlined_call_operand.vmem [shape: f32[1,256], index: 5, kind: input, shape index: {}]
  %s6 = inlined_call_operand.hbm [shape: f32[3,256,256], index: 6, kind: input, shape index: {}]
  %s7 = inlined_call_operand.vmem [shape: f32[1,256], index: 7, kind: input, shape index: {}]
  %s8 = inlined_call_operand.hbm [shape: f32[32,256], index: 8, kind: input, shape index: {}]
  %s9 = inlined_call_operand.hbm [shape: f32[32,256], index: 9, kind: output, shape index: {}]
  %s10 = sld [smem:[#allocation0]]
  $region93: #{tpu_custom_call.1} parent=0
    _
  %s12 = ssub.s32 1, %s10
  %s13 = scalar_select 0, %s12, %s10
  $region1: #{tpu_custom_call.1} parent=0
    #allocation2 [shape = 'u8[16384]{0}', space=vmem, size = 0x4000, scoped, tag = 'input window, operand 0']
    #allocation3 [shape = 's32[2]{0}', space=sflag, size = 0x8, scoped, tag = 'scoped memory for tpu_custom_call.1']
    #allocation4 [shape = 's32[2]{0}', space=sflag, size = 0x8, scoped, tag = 'scoped memory for tpu_custom_call.1']
    #allocation5 [shape = 'u8[24576]{0}', space=vmem, size = 0x6000, scoped, tag = 'input window, operand 1, single buffered']
    #allocation6 [shape = 's32[1]{0}', space=sflag, size = 0x4, scoped, tag = 'scoped memory for tpu_custom_call.1']
    #allocation7 [shape = 'u8[49152]{0}', space=vmem, size = 0xc000, scoped, tag = 'input window, operand 2, single buffered']
    #allocation8 [shape = 'u8[786432]{0}', space=vmem, size = 0xc0000, scoped, tag = 'input window, operand 4, single buffered']
    #allocation9 [shape = 's32[1]{0}', space=sflag, size = 0x4, scoped, tag = 'scoped memory for tpu_custom_call.1']
    #allocation10 [shape = 'u8[786432]{0}', space=vmem, size = 0xc0000, scoped, tag = 'input window, operand 6, single buffered']
    #allocation11 [shape = 'u8[32768]{0}', space=vmem, size = 0x8000, scoped, tag = 'input window, operand 8']
    #allocation12 [shape = 's32[2]{0}', space=sflag, size = 0x8, scoped, tag = 'scoped memory for tpu_custom_call.1']
    #allocation13 [shape = 'u8[32768]{0}', space=vmem, size = 0x8000, scoped, tag = 'output window, operand 0']
    %14 = vsyncpa [#allocation3], 0
    %s15 = scalar_lea.sflag [#allocation3], 1
    %16 = vsyncpa %s15, 0
    %17 = vsyncpa [#allocation6], 0
    %18 = vsyncpa [#allocation9], 0
    %19 = vsyncpa [#allocation12], 0
    %s20 = scalar_lea.sflag [#allocation12], 1
    %21 = vsyncpa %s20, 0
    %22 = vsyncpa [#allocation4], 0
    %s23 = scalar_lea.sflag [#allocation4], 1
    %24 = vsyncpa %s23, 0
    loop: start=0, step=1, limit=4
    $region2: #{tpu_custom_call.1} parent=1 // loop_pre_header
      _
    $region3: #{tpu_custom_call.1} parent=1 // loop_header
      %s26 = sphi 0, %s30
      %p27 = scmp.ge.s32.totalorder %s26, 4
      %s36 = sphi 0, %s38
      %s39 = sphi 0, %s36
      %s40 = sphi 0, %s39
      %s56 = sphi 0, %s40
      %s60 = sphi 0, %s60
      %s62 = sphi 0, %s60
      %s63 = sphi 0, %s62
      %s77 = sphi 0, %s63
      %s81 = sphi 0, %s81
      %s83 = sphi 0, %s81
      %s84 = sphi 0, %s83
      %s98 = sphi 0, %s84
      %s102 = sphi 0, %s102
      %s104 = sphi 0, %s102
      %s105 = sphi 0, %s104
      %s119 = sphi 0, %s105
      %s123 = sphi 0, %s123
      %s125 = sphi 0, %s123
      %s126 = sphi 0, %s125
      %s140 = sphi 0, %s126
      %s144 = sphi 0, %s144
      %s146 = sphi 0, %s144
      %s147 = sphi 0, %s146
      %s161 = sphi 0, %s147
      %s165 = sphi 0, %s165
      %s167 = sphi 0, %s165
      %s168 = sphi 0, %s167
      %s182 = sphi 0, %s168
      %s186 = sphi 0, %s186
      %s188 = sphi 0, %s186
      %s189 = sphi 0, %s188
      %s203 = sphi 0, %s189
      %s209 = sphi 0, %s211
      %s212 = sphi 0, %s209
      %s213 = sphi 0, %s212
      %s229 = sphi 0, %s213
      %s235 = sphi 0, %s237
      %s238 = sphi 0, %s235
      %s239 = sphi 0, %s238
      %s255 = sphi 0, %s239
    $region4: #{tpu_custom_call.1} parent=1 // loop_header_branch
      %29 = sbr.rel (%p27) target = $region8
    $region5: #{tpu_custom_call.1} parent=1 // loop_body
      %s31 = ssub.s32 %s26, 1
      %s32 = ssub.s32 %s26, 2
      %s33 = sadd.s32 %s26, 1
      %s34 = ssub.s32 %s26, %s33
      %p35 = scmp.eq.s32.totalorder %s34, 0
      %s37 = sadd.s32 %s36, 1
      %s38 = scalar_select %p35, %s36, %s37
      %p41 = pneg %p35
      %p42 = scmp.eq.s32.totalorder %s26, 1
      %p43 = por %p41, %p42
      %p44 = scmp.ne.s32.totalorder %s36, %s39
      %p45 = scmp.eq.s32.totalorder %s26, 0
      %p46 = por %p44, %p45
      %p47 = scmp.ne.s32.totalorder %s36, %s39
      %p48 = scmp.eq.s32.totalorder %s31, 1
      %p49 = por %p47, %p48
      %p50 = scmp.ne.s32.totalorder %s39, %s40
      %p51 = scmp.eq.s32.totalorder %s31, 0
      %p52 = por %p50, %p51
      %p53 = scmp.ne.s32.totalorder %s39, %s40
      %p54 = scmp.eq.s32.totalorder %s32, 1
      %p55 = por %p53, %p54
      %p57 = scmp.ne.s32.totalorder %s40, %s56
      %p58 = scmp.eq.s32.totalorder %s32, 0
      %p59 = por %p57, %p58
      %s61 = sadd.s32 %s60, 1
      %p64 = scmp.eq.s32.totalorder %s26, 1
      %p65 = scmp.ne.s32.totalorder %s60, %s62
      %p66 = scmp.eq.s32.totalorder %s26, 0
      %p67 = por %p65, %p66
      %p68 = scmp.ne.s32.totalorder %s60, %s62
      %p69 = scmp.eq.s32.totalorder %s31, 1
      %p70 = por %p68, %p69
      %p71 = scmp.ne.s32.totalorder %s62, %s63
      %p72 = scmp.eq.s32.totalorder %s31, 0
      %p73 = por %p71, %p72
      %p74 = scmp.ne.s32.totalorder %s62, %s63
      %p75 = scmp.eq.s32.totalorder %s32, 1
      %p76 = por %p74, %p75
      %p78 = scmp.ne.s32.totalorder %s63, %s77
      %p79 = scmp.eq.s32.totalorder %s32, 0
      %p80 = por %p78, %p79
      %s82 = sadd.s32 %s81, 1
      %p85 = scmp.eq.s32.totalorder %s26, 1
      %p86 = scmp.ne.s32.totalorder %s81, %s83
      %p87 = scmp.eq.s32.totalorder %s26, 0
      %p88 = por %p86, %p87
      %p89 = scmp.ne.s32.totalorder %s81, %s83
      %p90 = scmp.eq.s32.totalorder %s31, 1
      %p91 = por %p89, %p90
      %p92 = scmp.ne.s32.totalorder %s83, %s84
      %p93 = scmp.eq.s32.totalorder %s31, 0
      %p94 = por %p92, %p93
      %p95 = scmp.ne.s32.totalorder %s83, %s84
      %p96 = scmp.eq.s32.totalorder %s32, 1
      %p97 = por %p95, %p96
      %p99 = scmp.ne.s32.totalorder %s84, %s98
      %p100 = scmp.eq.s32.totalorder %s32, 0
      %p101 = por %p99, %p100
      %s103 = sadd.s32 %s102, 1
      %p106 = scmp.eq.s32.totalorder %s26, 1
      %p107 = scmp.ne.s32.totalorder %s102, %s104
      %p108 = scmp.eq.s32.totalorder %s26, 0
      %p109 = por %p107, %p108
      %p110 = scmp.ne.s32.totalorder %s102, %s104
      %p111 = scmp.eq.s32.totalorder %s31, 1
      %p112 = por %p110, %p111
      %p113 = scmp.ne.s32.totalorder %s104, %s105
      %p114 = scmp.eq.s32.totalorder %s31, 0
      %p115 = por %p113, %p114
      %p116 = scmp.ne.s32.totalorder %s104, %s105
      %p117 = scmp.eq.s32.totalorder %s32, 1
      %p118 = por %p116, %p117
      %p120 = scmp.ne.s32.totalorder %s105, %s119
      %p121 = scmp.eq.s32.totalorder %s32, 0
      %p122 = por %p120, %p121
      %s124 = sadd.s32 %s123, 1
      %p127 = scmp.eq.s32.totalorder %s26, 1
      %p128 = scmp.ne.s32.totalorder %s123, %s125
      %p129 = scmp.eq.s32.totalorder %s26, 0
      %p130 = por %p128, %p129
      %p131 = scmp.ne.s32.totalorder %s123, %s125
      %p132 = scmp.eq.s32.totalorder %s31, 1
      %p133 = por %p131, %p132
      %p134 = scmp.ne.s32.totalorder %s125, %s126
      %p135 = scmp.eq.s32.totalorder %s31, 0
      %p136 = por %p134, %p135
      %p137 = scmp.ne.s32.totalorder %s125, %s126
      %p138 = scmp.eq.s32.totalorder %s32, 1
      %p139 = por %p137, %p138
      %p141 = scmp.ne.s32.totalorder %s126, %s140
      %p142 = scmp.eq.s32.totalorder %s32, 0
      %p143 = por %p141, %p142
      %s145 = sadd.s32 %s144, 1
      %p148 = scmp.eq.s32.totalorder %s26, 1
      %p149 = scmp.ne.s32.totalorder %s144, %s146
      %p150 = scmp.eq.s32.totalorder %s26, 0
      %p151 = por %p149, %p150
      %p152 = scmp.ne.s32.totalorder %s144, %s146
      %p153 = scmp.eq.s32.totalorder %s31, 1
      %p154 = por %p152, %p153
      %p155 = scmp.ne.s32.totalorder %s146, %s147
      %p156 = scmp.eq.s32.totalorder %s31, 0
      %p157 = por %p155, %p156
      %p158 = scmp.ne.s32.totalorder %s146, %s147
      %p159 = scmp.eq.s32.totalorder %s32, 1
      %p160 = por %p158, %p159
      %p162 = scmp.ne.s32.totalorder %s147, %s161
      %p163 = scmp.eq.s32.totalorder %s32, 0
      %p164 = por %p162, %p163
      %s166 = sadd.s32 %s165, 1
      %p169 = scmp.eq.s32.totalorder %s26, 1
      %p170 = scmp.ne.s32.totalorder %s165, %s167
      %p171 = scmp.eq.s32.totalorder %s26, 0
      %p172 = por %p170, %p171
      %p173 = scmp.ne.s32.totalorder %s165, %s167
      %p174 = scmp.eq.s32.totalorder %s31, 1
      %p175 = por %p173, %p174
      %p176 = scmp.ne.s32.totalorder %s167, %s168
      %p177 = scmp.eq.s32.totalorder %s31, 0
      %p178 = por %p176, %p177
      %p179 = scmp.ne.s32.totalorder %s167, %s168
      %p180 = scmp.eq.s32.totalorder %s32, 1
      %p181 = por %p179, %p180
      %p183 = scmp.ne.s32.totalorder %s168, %s182
      %p184 = scmp.eq.s32.totalorder %s32, 0
      %p185 = por %p183, %p184
      %s187 = sadd.s32 %s186, 1
      %p190 = scmp.eq.s32.totalorder %s26, 1
      %p191 = scmp.ne.s32.totalorder %s186, %s188
      %p192 = scmp.eq.s32.totalorder %s26, 0
      %p193 = por %p191, %p192
      %p194 = scmp.ne.s32.totalorder %s186, %s188
      %p195 = scmp.eq.s32.totalorder %s31, 1
      %p196 = por %p194, %p195
      %p197 = scmp.ne.s32.totalorder %s188, %s189
      %p198 = scmp.eq.s32.totalorder %s31, 0
      %p199 = por %p197, %p198
      %p200 = scmp.ne.s32.totalorder %s188, %s189
      %p201 = scmp.eq.s32.totalorder %s32, 1
      %p202 = por %p200, %p201
      %p204 = scmp.ne.s32.totalorder %s189, %s203
      %p205 = scmp.eq.s32.totalorder %s32, 0
      %p206 = por %p204, %p205
      %s207 = ssub.s32 %s26, %s33
      %p208 = scmp.eq.s32.totalorder %s207, 0
      %s210 = sadd.s32 %s209, 1
      %s211 = scalar_select %p208, %s209, %s210
      %p214 = pneg %p208
      %p215 = scmp.eq.s32.totalorder %s26, 1
      %p216 = por %p214, %p215
      %p217 = scmp.ne.s32.totalorder %s209, %s212
      %p218 = scmp.eq.s32.totalorder %s26, 0
      %p219 = por %p217, %p218
      %p220 = scmp.ne.s32.totalorder %s209, %s212
      %p221 = scmp.eq.s32.totalorder %s31, 1
      %p222 = por %p220, %p221
      %p223 = scmp.ne.s32.totalorder %s212, %s213
      %p224 = scmp.eq.s32.totalorder %s31, 0
      %p225 = por %p223, %p224
      %p226 = scmp.ne.s32.totalorder %s212, %s213
      %p227 = scmp.eq.s32.totalorder %s32, 1
      %p228 = por %p226, %p227
      %p230 = scmp.ne.s32.totalorder %s213, %s229
      %p231 = scmp.eq.s32.totalorder %s32, 0
      %p232 = por %p230, %p231
      %s233 = ssub.s32 %s26, %s33
      %p234 = scmp.eq.s32.totalorder %s233, 0
      %s236 = sadd.s32 %s235, 1
      %s237 = scalar_select %p234, %s235, %s236
      %p240 = pneg %p234
      %p241 = scmp.eq.s32.totalorder %s26, 1
      %p242 = por %p240, %p241
      %p243 = scmp.ne.s32.totalorder %s235, %s238
      %p244 = scmp.eq.s32.totalorder %s26, 0
      %p245 = por %p243, %p244
      %p246 = scmp.ne.s32.totalorder %s235, %s238
      %p247 = scmp.eq.s32.totalorder %s31, 1
      %p248 = por %p246, %p247
      %p249 = scmp.ne.s32.totalorder %s238, %s239
      %p250 = scmp.eq.s32.totalorder %s31, 0
      %p251 = por %p249, %p250
      %p252 = scmp.ne.s32.totalorder %s238, %s239
      %p253 = scmp.eq.s32.totalorder %s32, 1
      %p254 = por %p252, %p253
      %p256 = scmp.ne.s32.totalorder %s239, %s255
      %p257 = scmp.eq.s32.totalorder %s32, 0
      %p258 = por %p256, %p257
      %p259 = scmp.le.s32.totalorder 1, %s26
      %p260 = scmp.lt.s32.totalorder %s26, 3
      %p261 = pnand %p259, %p260
      %p262 = pneg %p261
      // Predicated region
      $region9: #{tpu_custom_call.1} parent=5 // pred_check
        _
      $region10: #{tpu_custom_call.1} parent=5 // pred_check_branch
        %264 = sbr.rel (%p261) target = $region12
      $region11: #{tpu_custom_call.1} parent=5 // pred_region
        %s265 = ssub.s32 %s26, 1
        // Predicated region
        $region13: #{tpu_custom_call.1} parent=11 // pred_check
          %p266 = pneg %p73
        $region14: #{tpu_custom_call.1} parent=11 // pred_check_branch
          %268 = sbr.rel (%p266) target = $region16
        $region15: #{tpu_custom_call.1} parent=11 // pred_region
          %s270 = ssub.s32 768, 768
          %271 = vsyncadd [#allocation6], %s270
          %s272 = sshll.u32 [#allocation5], 4
          %s273 = int_to_ptr.vmem [resolvable:$true] %s272
          %278 = dma.hbm_to_vmem [thread:$0]  %s1, 768, %s273, [#allocation6], 128, 128, 8
        $region16: #{tpu_custom_call.1} parent=11 // pred_fallthru
          _
        // Predicated region
        $region17: #{tpu_custom_call.1} parent=11 // pred_check
          %p279 = pneg %p94
        $region18: #{tpu_custom_call.1} parent=11 // pred_check_branch
          %281 = sbr.rel (%p279) target = $region20
        $region19: #{tpu_custom_call.1} parent=11 // pred_region
          %s283 = ssub.s32 1536, 1536
          %284 = vsyncadd [#allocation6], %s283
          %s285 = sshll.u32 [#allocation7], 4
          %s286 = int_to_ptr.vmem [resolvable:$true] %s285
          %291 = dma.hbm_to_vmem [thread:$0]  %s2, 1536, %s286, [#allocation6], 256, 256, 16
        $region20: #{tpu_custom_call.1} parent=11 // pred_fallthru
          _
        // Predicated region
        $region21: #{tpu_custom_call.1} parent=11 // pred_check
          %p292 = pneg %p115
        $region22: #{tpu_custom_call.1} parent=11 // pred_check_branch
          %294 = sbr.rel (%p292) target = $region24
        $region23: #{tpu_custom_call.1} parent=11 // pred_region
          _
        $region24: #{tpu_custom_call.1} parent=11 // pred_fallthru
          _
        // Predicated region
        $region25: #{tpu_custom_call.1} parent=11 // pred_check
          %p295 = pneg %p136
        $region26: #{tpu_custom_call.1} parent=11 // pred_check_branch
          %297 = sbr.rel (%p295) target = $region28
        $region27: #{tpu_custom_call.1} parent=11 // pred_region
          %s299 = ssub.s32 24576, 24576
          %300 = vsyncadd [#allocation9], %s299
          %s301 = sshll.u32 [#allocation8], 4
          %s302 = int_to_ptr.vmem [resolvable:$true] %s301
          %307 = dma.hbm_to_vmem [thread:$0]  %s4, 24576, %s302, [#allocation9], 256, 256, 16
        $region28: #{tpu_custom_call.1} parent=11 // pred_fallthru
          _
        // Predicated region
        $region29: #{tpu_custom_call.1} parent=11 // pred_check
          %p308 = pneg %p157
        $region30: #{tpu_custom_call.1} parent=11 // pred_check_branch
          %310 = sbr.rel (%p308) target = $region32
        $region31: #{tpu_custom_call.1} parent=11 // pred_region
          _
        $region32: #{tpu_custom_call.1} parent=11 // pred_fallthru
          _
        // Predicated region
        $region33: #{tpu_custom_call.1} parent=11 // pred_check
          %p311 = pneg %p178
        $region34: #{tpu_custom_call.1} parent=11 // pred_check_branch
          %313 = sbr.rel (%p311) target = $region36
        $region35: #{tpu_custom_call.1} parent=11 // pred_region
          %s315 = ssub.s32 24576, 24576
          %316 = vsyncadd [#allocation9], %s315
          %s317 = sshll.u32 [#allocation10], 4
          %s318 = int_to_ptr.vmem [resolvable:$true] %s317
          %323 = dma.hbm_to_vmem [thread:$0]  %s6, 24576, %s318, [#allocation9], 256, 256, 16
        $region36: #{tpu_custom_call.1} parent=11 // pred_fallthru
          _
        // Predicated region
        $region37: #{tpu_custom_call.1} parent=11 // pred_check
          %p324 = pneg %p199
        $region38: #{tpu_custom_call.1} parent=11 // pred_check_branch
          %326 = sbr.rel (%p324) target = $region40
        $region39: #{tpu_custom_call.1} parent=11 // pred_region
          _
        $region40: #{tpu_custom_call.1} parent=11 // pred_fallthru
          _
      $region12: #{tpu_custom_call.1} parent=5 // pred_fallthru
        _
      %p327 = scmp.lt.s32.totalorder %s26, 2
      // Predicated region
      $region41: #{tpu_custom_call.1} parent=5 // pred_check
        %p328 = pneg %p327
      $region42: #{tpu_custom_call.1} parent=5 // pred_check_branch
        %330 = sbr.rel (%p328) target = $region44
      $region43: #{tpu_custom_call.1} parent=5 // pred_region
        // Predicated region
        $region45: #{tpu_custom_call.1} parent=43 // pred_check
          %p331 = pneg %p46
        $region46: #{tpu_custom_call.1} parent=43 // pred_check_branch
          %333 = sbr.rel (%p331) target = $region48
        $region47: #{tpu_custom_call.1} parent=43 // pred_region
          %s334 = sand.u32 %s36, 1
          %s335 = scalar_lea.sflag [#allocation3], %s334
          %s336 = sand.u32 %s36, 1
          %s337 = smul.addr %s336, 16
          %s338 = scalar_lea.vmem [#allocation2], %s337
          %s340 = ssub.s32 256, 256
          %341 = vsyncadd %s335, %s340
          %s342 = smul.addr %s26, 2
          %s343 = smul.addr %s342, 128
          %s344 = scalar_lea.hbm %s0, %s343
          %s345 = sshll.u32 %s338, 4
          %s346 = int_to_ptr.vmem [resolvable:$true] %s345
          %351 = dma.hbm_to_vmem [thread:$0]  %s344, 256, %s346, %s335, 128, 128, 8
        $region48: #{tpu_custom_call.1} parent=43 // pred_fallthru
          _
        // Predicated region
        $region49: #{tpu_custom_call.1} parent=43 // pred_check
          %p352 = pneg %p219
        $region50: #{tpu_custom_call.1} parent=43 // pred_check_branch
          %354 = sbr.rel (%p352) target = $region52
        $region51: #{tpu_custom_call.1} parent=43 // pred_region
          %s355 = sand.u32 %s209, 1
          %s356 = scalar_lea.sflag [#allocation12], %s355
          %s357 = sand.u32 %s209, 1
          %s358 = smul.addr %s357, 32
          %s359 = scalar_lea.vmem [#allocation11], %s358
          %s360 = smul.u32 2, %s26
          %s362 = ssub.s32 512, 512
          %363 = vsyncadd %s356, %s362
          %s364 = smul.addr %s360, 2
          %s365 = smul.addr %s364, 128
          %s366 = scalar_lea.hbm %s8, %s365
          %s367 = sshll.u32 %s359, 4
          %s368 = int_to_ptr.vmem [resolvable:$true] %s367
          %373 = dma.hbm_to_vmem [thread:$0]  %s366, 512, %s368, %s356, 256, 256, 16
        $region52: #{tpu_custom_call.1} parent=43 // pred_fallthru
          _
      $region44: #{tpu_custom_call.1} parent=5 // pred_fallthru
        _
      %p374 = scmp.le.s32.totalorder 1, %s26
      %p375 = scmp.lt.s32.totalorder %s26, 3
      %p376 = pnand %p374, %p375
      %p377 = pneg %p376
      // Predicated region
      $region53: #{tpu_custom_call.1} parent=5 // pred_check
        _
      $region54: #{tpu_custom_call.1} parent=5 // pred_check_branch
        %379 = sbr.rel (%p376) target = $region56
      $region55: #{tpu_custom_call.1} parent=5 // pred_region
        %s380 = ssub.s32 %s26, 1
        %s381 = sand.u32 %s39, 1
        %s382 = scalar_lea.sflag [#allocation3], %s381
        %s383 = sand.u32 %s39, 1
        %s384 = smul.addr %s383, 16
        %s385 = scalar_lea.vmem [#allocation2], %s384
        // Predicated region
        $region57: #{tpu_custom_call.1} parent=55 // pred_check
          %p386 = pneg %p52
        $region58: #{tpu_custom_call.1} parent=55 // pred_check_branch
          %388 = sbr.rel (%p386) target = $region60
        $region59: #{tpu_custom_call.1} parent=55 // pred_region
          %389 = dma.done %s382, 256
        $region60: #{tpu_custom_call.1} parent=55 // pred_fallthru
          _
        // Predicated region
        $region61: #{tpu_custom_call.1} parent=55 // pred_check
          %p390 = pneg %p73
        $region62: #{tpu_custom_call.1} parent=55 // pred_check_branch
          %392 = sbr.rel (%p390) target = $region64
        $region63: #{tpu_custom_call.1} parent=55 // pred_region
          %393 = dma.done [#allocation6], 768
        $region64: #{tpu_custom_call.1} parent=55 // pred_fallthru
          _
        // Predicated region
        $region65: #{tpu_custom_call.1} parent=55 // pred_check
          %p394 = pneg %p94
        $region66: #{tpu_custom_call.1} parent=55 // pred_check_branch
          %396 = sbr.rel (%p394) target = $region68
        $region67: #{tpu_custom_call.1} parent=55 // pred_region
          %397 = dma.done [#allocation6], 1536
        $region68: #{tpu_custom_call.1} parent=55 // pred_fallthru
          _
        // Predicated region
        $region69: #{tpu_custom_call.1} parent=55 // pred_check
          %p398 = pneg %p136
        $region70: #{tpu_custom_call.1} parent=55 // pred_check_branch
          %400 = sbr.rel (%p398) target = $region72
        $region71: #{tpu_custom_call.1} parent=55 // pred_region
          %401 = dma.done [#allocation9], 24576
        $region72: #{tpu_custom_call.1} parent=55 // pred_fallthru
          _
        // Predicated region
        $region73: #{tpu_custom_call.1} parent=55 // pred_check
          %p402 = pneg %p178
        $region74: #{tpu_custom_call.1} parent=55 // pred_check_branch
          %404 = sbr.rel (%p402) target = $region76
        $region75: #{tpu_custom_call.1} parent=55 // pred_region
          %405 = dma.done [#allocation9], 24576
        $region76: #{tpu_custom_call.1} parent=55 // pred_fallthru
          _
        %s406 = sand.u32 %s212, 1
        %s407 = scalar_lea.sflag [#allocation12], %s406
        %s408 = sand.u32 %s212, 1
        %s409 = smul.addr %s408, 32
        %s410 = scalar_lea.vmem [#allocation11], %s409
        // Predicated region
        $region77: #{tpu_custom_call.1} parent=55 // pred_check
          %p411 = pneg %p225
        $region78: #{tpu_custom_call.1} parent=55 // pred_check_branch
          %413 = sbr.rel (%p411) target = $region80
        $region79: #{tpu_custom_call.1} parent=55 // pred_region
          %414 = dma.done %s407, 512
        $region80: #{tpu_custom_call.1} parent=55 // pred_fallthru
          _
        %s415 = sand.u32 %s39, 1
        %s416 = scalar_lea.sflag [#allocation3], %s415
        %s417 = sand.u32 %s39, 1
        %s418 = smul.addr %s417, 16
        %s419 = scalar_lea.vmem [#allocation2], %s418
        %p420 = pneg %p52
        %p421 = pneg %p49
        %p422 = pneg %p73
        %p423 = pneg %p70
        %p424 = pneg %p94
        %p425 = pneg %p91
        %p426 = pneg %p115
        %p427 = pneg %p112
        %p428 = pneg %p136
        %p429 = pneg %p133
        %p430 = pneg %p157
        %p431 = pneg %p154
        %p432 = pneg %p178
        %p433 = pneg %p175
        %p434 = pneg %p199
        %p435 = pneg %p196
        %s436 = sand.u32 %s212, 1
        %s437 = scalar_lea.sflag [#allocation12], %s436
        %s438 = sand.u32 %s212, 1
        %s439 = smul.addr %s438, 32
        %s440 = scalar_lea.vmem [#allocation11], %s439
        %p441 = pneg %p225
        %p442 = pneg %p222
        %p443 = pneg %p251
        %p444 = pneg %p248
        %s445 = sand.u32 %s238, 1
        %s446 = scalar_lea.sflag [#allocation4], %s445
        %s447 = sand.u32 %s238, 1
        %s448 = smul.addr %s447, 32
        %s449 = scalar_lea.vmem [#allocation13], %s448
        %s450 = smul.u32 2, %s31
        %s451 = smul.u32 2, %s31
        %v452 = vld [vmem:[%s385] sm:$0xff]
        %v453 = vld [vmem:[%s385 + $0x8] sm:$0xff]
        %v454 = vld [vmem:[#allocation5] sm:$0xff]
        %v455 = vld [vmem:[#allocation5 + $0x8] sm:$0xff]
        %vm456 = vcmask 130048
        %v458 = vsel %vm456, %v454, 0
        %v461 = vsel %vm456, %v455, 0
        %463 = vmatprep.subr.mxu0 0.0
        %464 = vmatpush1.msra.mxu0 %v452
        %465 = vmatprep.subr.mxu0 0.0
        %466 = vmatpush1.msra.mxu0 %v453
        %467 = vmatprep.subr.mxu0 0.0
        %468 = vmatpush1.msra.mxu0 0.0
        %469 = vmatprep.subr.mxu0 0.0
        %470 = vmatpush1.msra.mxu0 0.0
        %471 = vmatprep.subr.mxu0 0.0
        %472 = vmatpush1.msra.mxu0 0.0
        %473 = vmatprep.subr.mxu0 0.0
        %474 = vmatpush1.msra.mxu0 0.0
        %475 = vmatprep.subr.mxu0 0.0
        %476 = vmatpush1.msra.mxu0 0.0
        %477 = vmatprep.subr.mxu0 0.0
        %478 = vmatpush1.msra.mxu0 0.0
        %479 = vmatprep.subr.mxu0 0.0
        %480 = vmatpush1.msra.mxu0 0.0
        %481 = vmatprep.subr.mxu0 0.0
        %482 = vmatpush1.msra.mxu0 0.0
        %483 = vmatprep.subr.mxu0 0.0
        %484 = vmatpush1.msra.mxu0 0.0
        %485 = vmatprep.subr.mxu0 0.0
        %486 = vmatpush1.msra.mxu0 0.0
        %487 = vmatprep.subr.mxu0 0.0
        %488 = vmatpush1.msra.mxu0 0.0
        %489 = vmatprep.subr.mxu0 0.0
        %490 = vmatpush1.msra.mxu0 0.0
        %491 = vmatprep.subr.mxu0 0.0
        %492 = vmatpush1.msra.mxu0 0.0
        %493 = vmatprep.subr.mxu0 0.0
        %494 = vmatpush1.msra.mxu0 0.0
        %495 = vmatprep.subr.mxu0 0.0
        %496 = vmatpush1.msra.mxu0 0.0
        %497 = vmatprep.subr.mxu0 0.0
        %498 = vmatpush1.msra.mxu0 0.0
        %499 = vmatprep.subr.mxu0 0.0
        %500 = vmatpush1.msra.mxu0 0.0
        %501 = vmatprep.subr.mxu0 0.0
        %502 = vmatpush1.msra.mxu0 0.0
        %503 = vmatprep.subr.mxu0 0.0
        %504 = vmatpush1.msra.mxu0 0.0
        %505 = vmatprep.subr.mxu0 0.0
        %506 = vmatpush1.msra.mxu0 0.0
        %507 = vmatprep.subr.mxu0 0.0
        %508 = vmatpush1.msra.mxu0 0.0
        %509 = vmatprep.subr.mxu0 0.0
        %510 = vmatpush1.msra.mxu0 0.0
        %511 = vmatprep.subr.mxu0 0.0
        %512 = vmatpush1.msra.mxu0 0.0
        %513 = vmatprep.subr.mxu0 0.0
        %514 = vmatpush1.msra.mxu0 0.0
        %515 = vmatprep.subr.mxu0 0.0
        %516 = vmatpush1.msra.mxu0 0.0
        %517 = vmatprep.subr.mxu0 0.0
        %518 = vmatpush1.msra.mxu0 0.0
        %519 = vmatprep.subr.mxu0 0.0
        %520 = vmatpush1.msra.mxu0 0.0
        %521 = vmatprep.subr.mxu0 0.0
        %522 = vmatpush1.msra.mxu0 0.0
        %523 = vmatprep.subr.mxu0 0.0
        %524 = vmatpush1.msra.mxu0 0.0
        %525 = vmatprep.subr.mxu0 0.0
        %526 = vmatpush1.msra.mxu0 0.0
        %527 = vmatprep.mubr.f32.mxu0 0.0
        %528 = vmatmul.mubr.f32.gmra.mrb[0].mxu0 %v458
        %v529 = vpop.f32.mrb[0].mxu0
        %v530 = vadd.f32 0.0, %v529
        %v531 = vpop.f32.mrb[0].mxu0
        %532 = vmatprep.mubr.f32.mxu0 0.0
        %533 = vmatmul.mubr.f32.gmra.mrb[0].mxu0 %v461
        %v534 = vpop.f32.mrb[0].mxu0
        %v535 = vadd.f32 0.0, %v534
        %v536 = vpop.f32.mrb[0].mxu0
        %537 = vdwg.mxu0
        %v538 = vld [vmem:[#allocation7] sm:$0xff]
        %v539 = vld [vmem:[#allocation7 + $0x8] sm:$0xff]
        %v540 = vld [vmem:[#allocation7 + $0x10] sm:$0xff]
        %v541 = vld [vmem:[#allocation7 + $0x18] sm:$0xff]
        %s542 = scalar_lea.vmem [#allocation5], 16
        %v543 = vld [vmem:[%s542] sm:$0xff]
        %v544 = vld [vmem:[%s542 + $0x8] sm:$0xff]
        %v546 = vsel %vm456, %v543, 0
        %v549 = vsel %vm456, %v544, 0
        %551 = vmatprep.subr.mxu0 0.0
        %552 = vmatpush1.msra.mxu0 %v452
        %553 = vmatprep.subr.mxu0 0.0
        %554 = vmatpush1.msra.mxu0 %v453
        %555 = vmatprep.subr.mxu0 0.0
        %556 = vmatpush1.msra.mxu0 0.0
        %557 = vmatprep.subr.mxu0 0.0
        %558 = vmatpush1.msra.mxu0 0.0
        %559 = vmatprep.subr.mxu0 0.0
        %560 = vmatpush1.msra.mxu0 0.0
        %561 = vmatprep.subr.mxu0 0.0
        %562 = vmatpush1.msra.mxu0 0.0
        %563 = vmatprep.subr.mxu0 0.0
        %564 = vmatpush1.msra.mxu0 0.0
        %565 = vmatprep.subr.mxu0 0.0
        %566 = vmatpush1.msra.mxu0 0.0
        %567 = vmatprep.subr.mxu0 0.0
        %568 = vmatpush1.msra.mxu0 0.0
        %569 = vmatprep.subr.mxu0 0.0
        %570 = vmatpush1.msra.mxu0 0.0
        %571 = vmatprep.subr.mxu0 0.0
        %572 = vmatpush1.msra.mxu0 0.0
        %573 = vmatprep.subr.mxu0 0.0
        %574 = vmatpush1.msra.mxu0 0.0
        %575 = vmatprep.subr.mxu0 0.0
        %576 = vmatpush1.msra.mxu0 0.0
        %577 = vmatprep.subr.mxu0 0.0
        %578 = vmatpush1.msra.mxu0 0.0
        %579 = vmatprep.subr.mxu0 0.0
        %580 = vmatpush1.msra.mxu0 0.0
        %581 = vmatprep.subr.mxu0 0.0
        %582 = vmatpush1.msra.mxu0 0.0
        %583 = vmatprep.subr.mxu0 0.0
        %584 = vmatpush1.msra.mxu0 0.0
        %585 = vmatprep.subr.mxu0 0.0
        %586 = vmatpush1.msra.mxu0 0.0
        %587 = vmatprep.subr.mxu0 0.0
        %588 = vmatpush1.msra.mxu0 0.0
        %589 = vmatprep.subr.mxu0 0.0
        %590 = vmatpush1.msra.mxu0 0.0
        %591 = vmatprep.subr.mxu0 0.0
        %592 = vmatpush1.msra.mxu0 0.0
        %593 = vmatprep.subr.mxu0 0.0
        %594 = vmatpush1.msra.mxu0 0.0
        %595 = vmatprep.subr.mxu0 0.0
        %596 = vmatpush1.msra.mxu0 0.0
        %597 = vmatprep.subr.mxu0 0.0
        %598 = vmatpush1.msra.mxu0 0.0
        %599 = vmatprep.subr.mxu0 0.0
        %600 = vmatpush1.msra.mxu0 0.0
        %601 = vmatprep.subr.mxu0 0.0
        %602 = vmatpush1.msra.mxu0 0.0
        %603 = vmatprep.subr.mxu0 0.0
        %604 = vmatpush1.msra.mxu0 0.0
        %605 = vmatprep.subr.mxu0 0.0
        %606 = vmatpush1.msra.mxu0 0.0
        %607 = vmatprep.subr.mxu0 0.0
        %608 = vmatpush1.msra.mxu0 0.0
        %609 = vmatprep.subr.mxu0 0.0
        %610 = vmatpush1.msra.mxu0 0.0
        %611 = vmatprep.subr.mxu0 0.0
        %612 = vmatpush1.msra.mxu0 0.0
        %613 = vmatprep.subr.mxu0 0.0
        %614 = vmatpush1.msra.mxu0 0.0
        %615 = vmatprep.mubr.f32.mxu0 0.0
        %616 = vmatmul.mubr.f32.gmra.mrb[0].mxu0 %v546
        %v617 = vpop.f32.mrb[0].mxu0
        %v618 = vadd.f32 0.0, %v617
        %v619 = vpop.f32.mrb[0].mxu0
        %620 = vmatprep.mubr.f32.mxu0 0.0
        %621 = vmatmul.mubr.f32.gmra.mrb[0].mxu0 %v549
        %v622 = vpop.f32.mrb[0].mxu0
        %v623 = vadd.f32 0.0, %v622
        %v624 = vpop.f32.mrb[0].mxu0
        %625 = vdwg.mxu0
        %s626 = scalar_lea.vmem [#allocation7], 32
        %v627 = vld [vmem:[%s626] sm:$0xff]
        %v628 = vld [vmem:[%s626 + $0x8] sm:$0xff]
        %v629 = vld [vmem:[%s626 + $0x10] sm:$0xff]
        %v630 = vld [vmem:[%s626 + $0x18] sm:$0xff]
        %v632 = vsel %vm456, %v618, 0
        %v635 = vsel %vm456, %v623, 0
        %637 = vmatprep.subr.mxu0 %v628
        %638 = vmatpush1.msra.mxu0 %v627
        %639 = vmatprep.subr.mxu0 %v630
        %640 = vmatpush1.msra.mxu0 %v629
        %641 = vmatprep.subr.mxu0 0.0
        %642 = vmatpush1.msra.mxu0 0.0
        %643 = vmatprep.subr.mxu0 0.0
        %644 = vmatpush1.msra.mxu0 0.0
        %645 = vmatprep.subr.mxu0 0.0
        %646 = vmatpush1.msra.mxu0 0.0
        %647 = vmatprep.subr.mxu0 0.0
        %648 = vmatpush1.msra.mxu0 0.0
        %649 = vmatprep.subr.mxu0 0.0
        %650 = vmatpush1.msra.mxu0 0.0
        %651 = vmatprep.subr.mxu0 0.0
        %652 = vmatpush1.msra.mxu0 0.0
        %653 = vmatprep.subr.mxu0 0.0
        %654 = vmatpush1.msra.mxu0 0.0
        %655 = vmatprep.subr.mxu0 0.0
        %656 = vmatpush1.msra.mxu0 0.0
        %657 = vmatprep.subr.mxu0 0.0
        %658 = vmatpush1.msra.mxu0 0.0
        %659 = vmatprep.subr.mxu0 0.0
        %660 = vmatpush1.msra.mxu0 0.0
        %661 = vmatprep.subr.mxu0 0.0
        %662 = vmatpush1.msra.mxu0 0.0
        %663 = vmatprep.subr.mxu0 0.0
        %664 = vmatpush1.msra.mxu0 0.0
        %665 = vmatprep.subr.mxu0 0.0
        %666 = vmatpush1.msra.mxu0 0.0
        %667 = vmatprep.subr.mxu0 0.0
        %668 = vmatpush1.msra.mxu0 0.0
        %669 = vmatprep.subr.mxu0 0.0
        %670 = vmatpush1.msra.mxu0 0.0
        %671 = vmatprep.subr.mxu0 0.0
        %672 = vmatpush1.msra.mxu0 0.0
        %673 = vmatprep.subr.mxu0 0.0
        %674 = vmatpush1.msra.mxu0 0.0
        %675 = vmatprep.subr.mxu0 0.0
        %676 = vmatpush1.msra.mxu0 0.0
        %677 = vmatprep.subr.mxu0 0.0
        %678 = vmatpush1.msra.mxu0 0.0
        %679 = vmatprep.subr.mxu0 0.0
        %680 = vmatpush1.msra.mxu0 0.0
        %681 = vmatprep.subr.mxu0 0.0
        %682 = vmatpush1.msra.mxu0 0.0
        %683 = vmatprep.subr.mxu0 0.0
        %684 = vmatpush1.msra.mxu0 0.0
        %685 = vmatprep.subr.mxu0 0.0
        %686 = vmatpush1.msra.mxu0 0.0
        %687 = vmatprep.subr.mxu0 0.0
        %688 = vmatpush1.msra.mxu0 0.0
        %689 = vmatprep.subr.mxu0 0.0
        %690 = vmatpush1.msra.mxu0 0.0
        %691 = vmatprep.subr.mxu0 0.0
        %692 = vmatpush1.msra.mxu0 0.0
        %693 = vmatprep.subr.mxu0 0.0
        %694 = vmatpush1.msra.mxu0 0.0
        %695 = vmatprep.subr.mxu0 0.0
        %696 = vmatpush1.msra.mxu0 0.0
        %697 = vmatprep.subr.mxu0 0.0
        %698 = vmatpush1.msra.mxu0 0.0
        %699 = vmatprep.subr.mxu0 0.0
        %700 = vmatpush1.msra.mxu0 0.0
        %701 = vmatprep.mubr.f32.mxu0 0.0
        %702 = vmatmul.mubr.f32.gmra.mrb[0].mxu0 %v632
        %v703 = vpop.f32.mrb[0].mxu0
        %v704 = vadd.f32 0.0, %v703
        %v705 = vpop.f32.mrb[0].mxu0
        %v706 = vadd.f32 0.0, %v705
        %707 = vmatprep.mubr.f32.mxu0 0.0
        %708 = vmatmul.mubr.f32.gmra.mrb[0].mxu0 %v635
        %v709 = vpop.f32.mrb[0].mxu0
        %v710 = vadd.f32 0.0, %v709
        %v711 = vpop.f32.mrb[0].mxu0
        %v712 = vadd.f32 0.0, %v711
        %713 = vdwg.mxu0
        %v715 = vsel %vm456, %v530, 0
        %v718 = vsel %vm456, %v535, 0
        %720 = vmatprep.subr.mxu0 %v539
        %721 = vmatpush1.msra.mxu0 %v538
        %722 = vmatprep.subr.mxu0 %v541
        %723 = vmatpush1.msra.mxu0 %v540
        %724 = vmatprep.subr.mxu0 0.0
        %725 = vmatpush1.msra.mxu0 0.0
        %726 = vmatprep.subr.mxu0 0.0
        %727 = vmatpush1.msra.mxu0 0.0
        %728 = vmatprep.subr.mxu0 0.0
        %729 = vmatpush1.msra.mxu0 0.0
        %730 = vmatprep.subr.mxu0 0.0
        %731 = vmatpush1.msra.mxu0 0.0
        %732 = vmatprep.subr.mxu0 0.0
        %733 = vmatpush1.msra.mxu0 0.0
        %734 = vmatprep.subr.mxu0 0.0
        %735 = vmatpush1.msra.mxu0 0.0
        %736 = vmatprep.subr.mxu0 0.0
        %737 = vmatpush1.msra.mxu0 0.0
        %738 = vmatprep.subr.mxu0 0.0
        %739 = vmatpush1.msra.mxu0 0.0
        %740 = vmatprep.subr.mxu0 0.0
        %741 = vmatpush1.msra.mxu0 0.0
        %742 = vmatprep.subr.mxu0 0.0
        %743 = vmatpush1.msra.mxu0 0.0
        %744 = vmatprep.subr.mxu0 0.0
        %745 = vmatpush1.msra.mxu0 0.0
        %746 = vmatprep.subr.mxu0 0.0
        %747 = vmatpush1.msra.mxu0 0.0
        %748 = vmatprep.subr.mxu0 0.0
        %749 = vmatpush1.msra.mxu0 0.0
        %750 = vmatprep.subr.mxu0 0.0
        %751 = vmatpush1.msra.mxu0 0.0
        %752 = vmatprep.subr.mxu0 0.0
        %753 = vmatpush1.msra.mxu0 0.0
        %754 = vmatprep.subr.mxu0 0.0
        %755 = vmatpush1.msra.mxu0 0.0
        %756 = vmatprep.subr.mxu0 0.0
        %757 = vmatpush1.msra.mxu0 0.0
        %758 = vmatprep.subr.mxu0 0.0
        %759 = vmatpush1.msra.mxu0 0.0
        %760 = vmatprep.subr.mxu0 0.0
        %761 = vmatpush1.msra.mxu0 0.0
        %762 = vmatprep.subr.mxu0 0.0
        %763 = vmatpush1.msra.mxu0 0.0
        %764 = vmatprep.subr.mxu0 0.0
        %765 = vmatpush1.msra.mxu0 0.0
        %766 = vmatprep.subr.mxu0 0.0
        %767 = vmatpush1.msra.mxu0 0.0
        %768 = vmatprep.subr.mxu0 0.0
        %769 = vmatpush1.msra.mxu0 0.0
        %770 = vmatprep.subr.mxu0 0.0
        %771 = vmatpush1.msra.mxu0 0.0
        %772 = vmatprep.subr.mxu0 0.0
        %773 = vmatpush1.msra.mxu0 0.0
        %774 = vmatprep.subr.mxu0 0.0
        %775 = vmatpush1.msra.mxu0 0.0
        %776 = vmatprep.subr.mxu0 0.0
        %777 = vmatpush1.msra.mxu0 0.0
        %778 = vmatprep.subr.mxu0 0.0
        %779 = vmatpush1.msra.mxu0 0.0
        %780 = vmatprep.subr.mxu0 0.0
        %781 = vmatpush1.msra.mxu0 0.0
        %782 = vmatprep.subr.mxu0 0.0
        %783 = vmatpush1.msra.mxu0 0.0
        %784 = vmatprep.mubr.f32.mxu0 0.0
        %785 = vmatmul.mubr.f32.gmra.mrb[0].mxu0 %v715
        %v786 = vpop.f32.mrb[0].mxu0
        %v787 = vadd.f32 %v704, %v786
        %v788 = vpop.f32.mrb[0].mxu0
        %v789 = vadd.f32 %v706, %v788
        %790 = vmatprep.mubr.f32.mxu0 0.0
        %791 = vmatmul.mubr.f32.gmra.mrb[0].mxu0 %v718
        %v792 = vpop.f32.mrb[0].mxu0
        %v793 = vadd.f32 %v710, %v792
        %v794 = vpop.f32.mrb[0].mxu0
        %v795 = vadd.f32 %v712, %v794
        %796 = vdwg.mxu0
        %s797 = scalar_lea.vmem [#allocation5], 32
        %v798 = vld [vmem:[%s797] sm:$0xff]
        %v799 = vld [vmem:[%s797 + $0x8] sm:$0xff]
        %v801 = vsel %vm456, %v798, 0
        %v804 = vsel %vm456, %v799, 0
        %806 = vmatprep.subr.mxu0 0.0
        %807 = vmatpush1.msra.mxu0 %v452
        %808 = vmatprep.subr.mxu0 0.0
        %809 = vmatpush1.msra.mxu0 %v453
        %810 = vmatprep.subr.mxu0 0.0
        %811 = vmatpush1.msra.mxu0 0.0
        %812 = vmatprep.subr.mxu0 0.0
        %813 = vmatpush1.msra.mxu0 0.0
        %814 = vmatprep.subr.mxu0 0.0
        %815 = vmatpush1.msra.mxu0 0.0
        %816 = vmatprep.subr.mxu0 0.0
        %817 = vmatpush1.msra.mxu0 0.0
        %818 = vmatprep.subr.mxu0 0.0
        %819 = vmatpush1.msra.mxu0 0.0
        %820 = vmatprep.subr.mxu0 0.0
        %821 = vmatpush1.msra.mxu0 0.0
        %822 = vmatprep.subr.mxu0 0.0
        %823 = vmatpush1.msra.mxu0 0.0
        %824 = vmatprep.subr.mxu0 0.0
        %825 = vmatpush1.msra.mxu0 0.0
        %826 = vmatprep.subr.mxu0 0.0
        %827 = vmatpush1.msra.mxu0 0.0
        %828 = vmatprep.subr.mxu0 0.0
        %829 = vmatpush1.msra.mxu0 0.0
        %830 = vmatprep.subr.mxu0 0.0
        %831 = vmatpush1.msra.mxu0 0.0
        %832 = vmatprep.subr.mxu0 0.0
        %833 = vmatpush1.msra.mxu0 0.0
        %834 = vmatprep.subr.mxu0 0.0
        %835 = vmatpush1.msra.mxu0 0.0
        %836 = vmatprep.subr.mxu0 0.0
        %837 = vmatpush1.msra.mxu0 0.0
        %838 = vmatprep.subr.mxu0 0.0
        %839 = vmatpush1.msra.mxu0 0.0
        %840 = vmatprep.subr.mxu0 0.0
        %841 = vmatpush1.msra.mxu0 0.0
        %842 = vmatprep.subr.mxu0 0.0
        %843 = vmatpush1.msra.mxu0 0.0
        %844 = vmatprep.subr.mxu0 0.0
        %845 = vmatpush1.msra.mxu0 0.0
        %846 = vmatprep.subr.mxu0 0.0
        %847 = vmatpush1.msra.mxu0 0.0
        %848 = vmatprep.subr.mxu0 0.0
        %849 = vmatpush1.msra.mxu0 0.0
        %850 = vmatprep.subr.mxu0 0.0
        %851 = vmatpush1.msra.mxu0 0.0
        %852 = vmatprep.subr.mxu0 0.0
        %853 = vmatpush1.msra.mxu0 0.0
        %854 = vmatprep.subr.mxu0 0.0
        %855 = vmatpush1.msra.mxu0 0.0
        %856 = vmatprep.subr.mxu0 0.0
        %857 = vmatpush1.msra.mxu0 0.0
        %858 = vmatprep.subr.mxu0 0.0
        %859 = vmatpush1.msra.mxu0 0.0
        %860 = vmatprep.subr.mxu0 0.0
        %861 = vmatpush1.msra.mxu0 0.0
        %862 = vmatprep.subr.mxu0 0.0
        %863 = vmatpush1.msra.mxu0 0.0
        %864 = vmatprep.subr.mxu0 0.0
        %865 = vmatpush1.msra.mxu0 0.0
        %866 = vmatprep.subr.mxu0 0.0
        %867 = vmatpush1.msra.mxu0 0.0
        %868 = vmatprep.subr.mxu0 0.0
        %869 = vmatpush1.msra.mxu0 0.0
        %870 = vmatprep.mubr.f32.mxu0 0.0
        %871 = vmatmul.mubr.f32.gmra.mrb[0].mxu0 %v801
        %v872 = vpop.f32.mrb[0].mxu0
        %v873 = vadd.f32 0.0, %v872
        %v874 = vpop.f32.mrb[0].mxu0
        %875 = vmatprep.mubr.f32.mxu0 0.0
        %876 = vmatmul.mubr.f32.gmra.mrb[0].mxu0 %v804
        %v877 = vpop.f32.mrb[0].mxu0
        %v878 = vadd.f32 0.0, %v877
        %v879 = vpop.f32.mrb[0].mxu0
        %880 = vdwg.mxu0
        %s881 = scalar_lea.vmem [#allocation7], 64
        %v882 = vld [vmem:[%s881] sm:$0xff]
        %v883 = vld [vmem:[%s881 + $0x8] sm:$0xff]
        %v884 = vld [vmem:[%s881 + $0x10] sm:$0xff]
        %v885 = vld [vmem:[%s881 + $0x18] sm:$0xff]
        %v887 = vsel %vm456, %v873, 0
        %v890 = vsel %vm456, %v878, 0
        %892 = vmatprep.subr.mxu0 %v883
        %893 = vmatpush1.msra.mxu0 %v882
        %894 = vmatprep.subr.mxu0 %v885
        %895 = vmatpush1.msra.mxu0 %v884
        %896 = vmatprep.subr.mxu0 0.0
        %897 = vmatpush1.msra.mxu0 0.0
        %898 = vmatprep.subr.mxu0 0.0
        %899 = vmatpush1.msra.mxu0 0.0
        %900 = vmatprep.subr.mxu0 0.0
        %901 = vmatpush1.msra.mxu0 0.0
        %902 = vmatprep.subr.mxu0 0.0
        %903 = vmatpush1.msra.mxu0 0.0
        %904 = vmatprep.subr.mxu0 0.0
        %905 = vmatpush1.msra.mxu0 0.0
        %906 = vmatprep.subr.mxu0 0.0
        %907 = vmatpush1.msra.mxu0 0.0
        %908 = vmatprep.subr.mxu0 0.0
        %909 = vmatpush1.msra.mxu0 0.0
        %910 = vmatprep.subr.mxu0 0.0
        %911 = vmatpush1.msra.mxu0 0.0
        %912 = vmatprep.subr.mxu0 0.0
        %913 = vmatpush1.msra.mxu0 0.0
        %914 = vmatprep.subr.mxu0 0.0
        %915 = vmatpush1.msra.mxu0 0.0
        %916 = vmatprep.subr.mxu0 0.0
        %917 = vmatpush1.msra.mxu0 0.0
        %918 = vmatprep.subr.mxu0 0.0
        %919 = vmatpush1.msra.mxu0 0.0
        %920 = vmatprep.subr.mxu0 0.0
        %921 = vmatpush1.msra.mxu0 0.0
        %922 = vmatprep.subr.mxu0 0.0
        %923 = vmatpush1.msra.mxu0 0.0
        %924 = vmatprep.subr.mxu0 0.0
        %925 = vmatpush1.msra.mxu0 0.0
        %926 = vmatprep.subr.mxu0 0.0
        %927 = vmatpush1.msra.mxu0 0.0
        %928 = vmatprep.subr.mxu0 0.0
        %929 = vmatpush1.msra.mxu0 0.0
        %930 = vmatprep.subr.mxu0 0.0
        %931 = vmatpush1.msra.mxu0 0.0
        %932 = vmatprep.subr.mxu0 0.0
        %933 = vmatpush1.msra.mxu0 0.0
        %934 = vmatprep.subr.mxu0 0.0
        %935 = vmatpush1.msra.mxu0 0.0
        %936 = vmatprep.subr.mxu0 0.0
        %937 = vmatpush1.msra.mxu0 0.0
        %938 = vmatprep.subr.mxu0 0.0
        %939 = vmatpush1.msra.mxu0 0.0
        %940 = vmatprep.subr.mxu0 0.0
        %941 = vmatpush1.msra.mxu0 0.0
        %942 = vmatprep.subr.mxu0 0.0
        %943 = vmatpush1.msra.mxu0 0.0
        %944 = vmatprep.subr.mxu0 0.0
        %945 = vmatpush1.msra.mxu0 0.0
        %946 = vmatprep.subr.mxu0 0.0
        %947 = vmatpush1.msra.mxu0 0.0
        %948 = vmatprep.subr.mxu0 0.0
        %949 = vmatpush1.msra.mxu0 0.0
        %950 = vmatprep.subr.mxu0 0.0
        %951 = vmatpush1.msra.mxu0 0.0
        %952 = vmatprep.subr.mxu0 0.0
        %953 = vmatpush1.msra.mxu0 0.0
        %954 = vmatprep.subr.mxu0 0.0
        %955 = vmatpush1.msra.mxu0 0.0
        %956 = vmatprep.mubr.f32.mxu0 0.0
        %957 = vmatmul.mubr.f32.gmra.mrb[0].mxu0 %v887
        %v958 = vpop.f32.mrb[0].mxu0
        %v959 = vadd.f32 0.0, %v958
        %v960 = vpop.f32.mrb[0].mxu0
        %v961 = vadd.f32 0.0, %v960
        %962 = vmatprep.mubr.f32.mxu0 0.0
        %963 = vmatmul.mubr.f32.gmra.mrb[0].mxu0 %v890
        %v964 = vpop.f32.mrb[0].mxu0
        %v965 = vadd.f32 0.0, %v964
        %v966 = vpop.f32.mrb[0].mxu0
        %v967 = vadd.f32 0.0, %v966
        %968 = vdwg.mxu0
        %v969 = vadd.f32 %v787, %v959
        %v970 = vadd.f32 %v789, %v961
        %v971 = vadd.f32 %v793, %v965
        %v972 = vadd.f32 %v795, %v967
        %v973 = vld [vmem:[%s3] sm:$0x3]
        %v975 = vlaneseq
        %v976 = vshrl.u32 %v975, 7
        %v977 = vsub.s32 0, %v976
        %v978 = vrot.slane %v973, %v977
        %v979 = vlaneseq
        %v980 = vshrl.u32 %v979, 7
        %v981 = vsub.s32 1, %v980
        %v982 = vrot.slane %v973, %v981
        %v985 = vadd.f32 %v969, %v978
        %v986 = vadd.f32 %v970, %v982
        %v987 = vadd.f32 %v971, %v978
        %v988 = vadd.f32 %v972, %v982
        %989 = vmatprep.subr.mxu0 %v986
        %990 = vmatpush1.msra.mxu0 %v985
        %991 = vmatprep.subr.mxu0 %v988
        %992 = vmatpush1.msra.mxu0 %v987
        %993 = vmatprep.subr.mxu0 0.0
        %994 = vmatpush1.msra.mxu0 0.0
        %995 = vmatprep.subr.mxu0 0.0
        %996 = vmatpush1.msra.mxu0 0.0
        %997 = vmatprep.subr.mxu0 0.0
        %998 = vmatpush1.msra.mxu0 0.0
        %999 = vmatprep.subr.mxu0 0.0
        %1000 = vmatpush1.msra.mxu0 0.0
        %1001 = vmatprep.subr.mxu0 0.0
        %1002 = vmatpush1.msra.mxu0 0.0
        %1003 = vmatprep.subr.mxu0 0.0
        %1004 = vmatpush1.msra.mxu0 0.0
        %1005 = vmatprep.subr.mxu0 0.0
        %1006 = vmatpush1.msra.mxu0 0.0
        %1007 = vmatprep.subr.mxu0 0.0
        %1008 = vmatpush1.msra.mxu0 0.0
        %1009 = vmatprep.subr.mxu0 0.0
        %1010 = vmatpush1.msra.mxu0 0.0
        %1011 = vmatprep.subr.mxu0 0.0
        %1012 = vmatpush1.msra.mxu0 0.0
        %1013 = vmatprep.subr.mxu0 0.0
        %1014 = vmatpush1.msra.mxu0 0.0
        %1015 = vmatprep.subr.mxu0 0.0
        %1016 = vmatpush1.msra.mxu0 0.0
        %1017 = vmatprep.subr.mxu0 0.0
        %1018 = vmatpush1.msra.mxu0 0.0
        %1019 = vmatprep.subr.mxu0 0.0
        %1020 = vmatpush1.msra.mxu0 0.0
        %1021 = vmatprep.subr.mxu0 0.0
        %1022 = vmatpush1.msra.mxu0 0.0
        %1023 = vmatprep.subr.mxu0 0.0
        %1024 = vmatpush1.msra.mxu0 0.0
        %1025 = vmatprep.subr.mxu0 0.0
        %1026 = vmatpush1.msra.mxu0 0.0
        %1027 = vmatprep.subr.mxu0 0.0
        %1028 = vmatpush1.msra.mxu0 0.0
        %1029 = vmatprep.subr.mxu0 0.0
        %1030 = vmatpush1.msra.mxu0 0.0
        %1031 = vmatprep.subr.mxu0 0.0
        %1032 = vmatpush1.msra.mxu0 0.0
        %1033 = vmatprep.subr.mxu0 0.0
        %1034 = vmatpush1.msra.mxu0 0.0
        %1035 = vmatprep.subr.mxu0 0.0
        %1036 = vmatpush1.msra.mxu0 0.0
        %1037 = vmatprep.subr.mxu0 0.0
        %1038 = vmatpush1.msra.mxu0 0.0
        %1039 = vmatprep.subr.mxu0 0.0
        %1040 = vmatpush1.msra.mxu0 0.0
        %1041 = vmatprep.subr.mxu0 0.0
        %1042 = vmatpush1.msra.mxu0 0.0
        %1043 = vmatprep.subr.mxu0 0.0
        %1044 = vmatpush1.msra.mxu0 0.0
        %1045 = vmatprep.subr.mxu0 0.0
        %1046 = vmatpush1.msra.mxu0 0.0
        %1047 = vmatprep.subr.mxu0 0.0
        %1048 = vmatpush1.msra.mxu0 0.0
        %1049 = vmatprep.subr.mxu0 0.0
        %1050 = vmatpush1.msra.mxu0 0.0
        %1051 = vmatprep.subr.mxu0 0.0
        %1052 = vmatpush1.msra.mxu0 0.0
        %1053 = vmatprep.mubr.f32.mxu0 0.0
        %1054 = vmatmul.mubr.f32.gmra.mrb[0].mxu0 %v458
        %v1055 = vpop.f32.mrb[0].mxu0
        %v1056 = vadd.f32 0.0, %v1055
        %v1057 = vpop.f32.mrb[0].mxu0
        %v1058 = vadd.f32 0.0, %v1057
        %1059 = vmatprep.mubr.f32.mxu0 0.0
        %1060 = vmatmul.mubr.f32.gmra.mrb[0].mxu0 %v461
        %v1061 = vpop.f32.mrb[0].mxu0
        %v1062 = vadd.f32 0.0, %v1061
        %v1063 = vpop.f32.mrb[0].mxu0
        %v1064 = vadd.f32 0.0, %v1063
        %1065 = vdwg.mxu0
        %v1066 = vld [vmem:[#allocation8] sm:$0xff]
        %v1067 = vld [vmem:[#allocation8 + $0x8] sm:$0xff]
        %v1068 = vld [vmem:[#allocation8 + $0x10] sm:$0xff]
        %v1069 = vld [vmem:[#allocation8 + $0x18] sm:$0xff]
        %v1070 = vld [vmem:[#allocation8 + $0x20] sm:$0xff]
        %v1071 = vld [vmem:[#allocation8 + $0x28] sm:$0xff]
        %v1072 = vld [vmem:[#allocation8 + $0x30] sm:$0xff]
        %v1073 = vld [vmem:[#allocation8 + $0x38] sm:$0xff]
        %v1074 = vld [vmem:[#allocation8 + $0x40] sm:$0xff]
        %v1075 = vld [vmem:[#allocation8 + $0x48] sm:$0xff]
        %v1076 = vld [vmem:[#allocation8 + $0x50] sm:$0xff]
        %v1077 = vld [vmem:[#allocation8 + $0x58] sm:$0xff]
        %v1078 = vld [vmem:[#allocation8 + $0x60] sm:$0xff]
        %v1079 = vld [vmem:[#allocation8 + $0x68] sm:$0xff]
        %v1080 = vld [vmem:[#allocation8 + $0x70] sm:$0xff]
        %v1081 = vld [vmem:[#allocation8 + $0x78] sm:$0xff]
        %v1082 = vld [vmem:[#allocation8 + $0x80] sm:$0xff]
        %v1083 = vld [vmem:[#allocation8 + $0x88] sm:$0xff]
        %v1084 = vld [vmem:[#allocation8 + $0x90] sm:$0xff]
        %v1085 = vld [vmem:[#allocation8 + $0x98] sm:$0xff]
        %v1086 = vld [vmem:[#allocation8 + $0xa0] sm:$0xff]
        %v1087 = vld [vmem:[#allocation8 + $0xa8] sm:$0xff]
        %v1088 = vld [vmem:[#allocation8 + $0xb0] sm:$0xff]
        %v1089 = vld [vmem:[#allocation8 + $0xb8] sm:$0xff]
        %v1090 = vld [vmem:[#allocation8 + $0xc0] sm:$0xff]
        %v1091 = vld [vmem:[#allocation8 + $0xc8] sm:$0xff]
        %v1092 = vld [vmem:[#allocation8 + $0xd0] sm:$0xff]
        %v1093 = vld [vmem:[#allocation8 + $0xd8] sm:$0xff]
        %v1094 = vld [vmem:[#allocation8 + $0xe0] sm:$0xff]
        %v1095 = vld [vmem:[#allocation8 + $0xe8] sm:$0xff]
        %v1096 = vld [vmem:[#allocation8 + $0xf0] sm:$0xff]
        %v1097 = vld [vmem:[#allocation8 + $0xf8] sm:$0xff]
        %v1098 = vld [vmem:[#allocation8 + $0x100] sm:$0xff]
        %v1099 = vld [vmem:[#allocation8 + $0x108] sm:$0xff]
        %v1100 = vld [vmem:[#allocation8 + $0x110] sm:$0xff]
        %v1101 = vld [vmem:[#allocation8 + $0x118] sm:$0xff]
        %v1102 = vld [vmem:[#allocation8 + $0x120] sm:$0xff]
        %v1103 = vld [vmem:[#allocation8 + $0x128] sm:$0xff]
        %v1104 = vld [vmem:[#allocation8 + $0x130] sm:$0xff]
        %v1105 = vld [vmem:[#allocation8 + $0x138] sm:$0xff]
        %v1106 = vld [vmem:[#allocation8 + $0x140] sm:$0xff]
        %v1107 = vld [vmem:[#allocation8 + $0x148] sm:$0xff]
        %v1108 = vld [vmem:[#allocation8 + $0x150] sm:$0xff]
        %v1109 = vld [vmem:[#allocation8 + $0x158] sm:$0xff]
        %v1110 = vld [vmem:[#allocation8 + $0x160] sm:$0xff]
        %v1111 = vld [vmem:[#allocation8 + $0x168] sm:$0xff]
        %v1112 = vld [vmem:[#allocation8 + $0x170] sm:$0xff]
        %v1113 = vld [vmem:[#allocation8 + $0x178] sm:$0xff]
        %v1114 = vld [vmem:[#allocation8 + $0x180] sm:$0xff]
        %v1115 = vld [vmem:[#allocation8 + $0x188] sm:$0xff]
        %v1116 = vld [vmem:[#allocation8 + $0x190] sm:$0xff]
        %v1117 = vld [vmem:[#allocation8 + $0x198] sm:$0xff]
        %v1118 = vld [vmem:[#allocation8 + $0x1a0] sm:$0xff]
        %v1119 = vld [vmem:[#allocation8 + $0x1a8] sm:$0xff]
        %v1120 = vld [vmem:[#allocation8 + $0x1b0] sm:$0xff]
        %v1121 = vld [vmem:[#allocation8 + $0x1b8] sm:$0xff]
        %v1122 = vld [vmem:[#allocation8 + $0x1c0] sm:$0xff]
        %v1123 = vld [vmem:[#allocation8 + $0x1c8] sm:$0xff]
        %v1124 = vld [vmem:[#allocation8 + $0x1d0] sm:$0xff]
        %v1125 = vld [vmem:[#allocation8 + $0x1d8] sm:$0xff]
        %v1126 = vld [vmem:[#allocation8 + $0x1e0] sm:$0xff]
        %v1127 = vld [vmem:[#allocation8 + $0x1e8] sm:$0xff]
        %v1128 = vld [vmem:[#allocation8 + $0x1f0] sm:$0xff]
        %v1129 = vld [vmem:[#allocation8 + $0x1f8] sm:$0xff]
        %1130 = vmatprep.subr.mxu0 %v986
        %1131 = vmatpush1.msra.mxu0 %v985
        %1132 = vmatprep.subr.mxu0 %v988
        %1133 = vmatpush1.msra.mxu0 %v987
        %1134 = vmatprep.subr.mxu0 0.0
        %1135 = vmatpush1.msra.mxu0 0.0
        %1136 = vmatprep.subr.mxu0 0.0
        %1137 = vmatpush1.msra.mxu0 0.0
        %1138 = vmatprep.subr.mxu0 0.0
        %1139 = vmatpush1.msra.mxu0 0.0
        %1140 = vmatprep.subr.mxu0 0.0
        %1141 = vmatpush1.msra.mxu0 0.0
        %1142 = vmatprep.subr.mxu0 0.0
        %1143 = vmatpush1.msra.mxu0 0.0
        %1144 = vmatprep.subr.mxu0 0.0
        %1145 = vmatpush1.msra.mxu0 0.0
        %1146 = vmatprep.subr.mxu0 0.0
        %1147 = vmatpush1.msra.mxu0 0.0
        %1148 = vmatprep.subr.mxu0 0.0
        %1149 = vmatpush1.msra.mxu0 0.0
        %1150 = vmatprep.subr.mxu0 0.0
        %1151 = vmatpush1.msra.mxu0 0.0
        %1152 = vmatprep.subr.mxu0 0.0
        %1153 = vmatpush1.msra.mxu0 0.0
        %1154 = vmatprep.subr.mxu0 0.0
        %1155 = vmatpush1.msra.mxu0 0.0
        %1156 = vmatprep.subr.mxu0 0.0
        %1157 = vmatpush1.msra.mxu0 0.0
        %1158 = vmatprep.subr.mxu0 0.0
        %1159 = vmatpush1.msra.mxu0 0.0
        %1160 = vmatprep.subr.mxu0 0.0
        %1161 = vmatpush1.msra.mxu0 0.0
        %1162 = vmatprep.subr.mxu0 0.0
        %1163 = vmatpush1.msra.mxu0 0.0
        %1164 = vmatprep.subr.mxu0 0.0
        %1165 = vmatpush1.msra.mxu0 0.0
        %1166 = vmatprep.subr.mxu0 0.0
        %1167 = vmatpush1.msra.mxu0 0.0
        %1168 = vmatprep.subr.mxu0 0.0
        %1169 = vmatpush1.msra.mxu0 0.0
        %1170 = vmatprep.subr.mxu0 0.0
        %1171 = vmatpush1.msra.mxu0 0.0
        %1172 = vmatprep.subr.mxu0 0.0
        %1173 = vmatpush1.msra.mxu0 0.0
        %1174 = vmatprep.subr.mxu0 0.0
        %1175 = vmatpush1.msra.mxu0 0.0
        %1176 = vmatprep.subr.mxu0 0.0
        %1177 = vmatpush1.msra.mxu0 0.0
        %1178 = vmatprep.subr.mxu0 0.0
        %1179 = vmatpush1.msra.mxu0 0.0
        %1180 = vmatprep.subr.mxu0 0.0
        %1181 = vmatpush1.msra.mxu0 0.0
        %1182 = vmatprep.subr.mxu0 0.0
        %1183 = vmatpush1.msra.mxu0 0.0
        %1184 = vmatprep.subr.mxu0 0.0
        %1185 = vmatpush1.msra.mxu0 0.0
        %1186 = vmatprep.subr.mxu0 0.0
        %1187 = vmatpush1.msra.mxu0 0.0
        %1188 = vmatprep.subr.mxu0 0.0
        %1189 = vmatpush1.msra.mxu0 0.0
        %1190 = vmatprep.subr.mxu0 0.0
        %1191 = vmatpush1.msra.mxu0 0.0
        %1192 = vmatprep.subr.mxu0 0.0
        %1193 = vmatpush1.msra.mxu0 0.0
        %1194 = vmatprep.mubr.f32.mxu0 0.0
        %1195 = vmatmul.mubr.f32.gmra.mrb[0].mxu0 %v546
        %v1196 = vpop.f32.mrb[0].mxu0
        %v1197 = vadd.f32 0.0, %v1196
        %v1198 = vpop.f32.mrb[0].mxu0
        %v1199 = vadd.f32 0.0, %v1198
        %1200 = vmatprep.mubr.f32.mxu0 0.0
        %1201 = vmatmul.mubr.f32.gmra.mrb[0].mxu0 %v549
        %v1202 = vpop.f32.mrb[0].mxu0
        %v1203 = vadd.f32 0.0, %v1202
        %v1204 = vpop.f32.mrb[0].mxu0
        %v1205 = vadd.f32 0.0, %v1204
        %1206 = vdwg.mxu0
        %s1207 = scalar_lea.vmem [#allocation8], 512
        %v1208 = vld [vmem:[%s1207] sm:$0xff]
        %v1209 = vld [vmem:[%s1207 + $0x8] sm:$0xff]
        %v1210 = vld [vmem:[%s1207 + $0x10] sm:$0xff]
        %v1211 = vld [vmem:[%s1207 + $0x18] sm:$0xff]
        %v1212 = vld [vmem:[%s1207 + $0x20] sm:$0xff]
        %v1213 = vld [vmem:[%s1207 + $0x28] sm:$0xff]
        %v1214 = vld [vmem:[%s1207 + $0x30] sm:$0xff]
        %v1215 = vld [vmem:[%s1207 + $0x38] sm:$0xff]
        %v1216 = vld [vmem:[%s1207 + $0x40] sm:$0xff]
        %v1217 = vld [vmem:[%s1207 + $0x48] sm:$0xff]
        %v1218 = vld [vmem:[%s1207 + $0x50] sm:$0xff]
        %v1219 = vld [vmem:[%s1207 + $0x58] sm:$0xff]
        %v1220 = vld [vmem:[%s1207 + $0x60] sm:$0xff]
        %v1221 = vld [vmem:[%s1207 + $0x68] sm:$0xff]
        %v1222 = vld [vmem:[%s1207 + $0x70] sm:$0xff]
        %v1223 = vld [vmem:[%s1207 + $0x78] sm:$0xff]
        %v1224 = vld [vmem:[%s1207 + $0x80] sm:$0xff]
        %v1225 = vld [vmem:[%s1207 + $0x88] sm:$0xff]
        %v1226 = vld [vmem:[%s1207 + $0x90] sm:$0xff]
        %v1227 = vld [vmem:[%s1207 + $0x98] sm:$0xff]
        %v1228 = vld [vmem:[%s1207 + $0xa0] sm:$0xff]
        %v1229 = vld [vmem:[%s1207 + $0xa8] sm:$0xff]
        %v1230 = vld [vmem:[%s1207 + $0xb0] sm:$0xff]
        %v1231 = vld [vmem:[%s1207 + $0xb8] sm:$0xff]
        %v1232 = vld [vmem:[%s1207 + $0xc0] sm:$0xff]
        %v1233 = vld [vmem:[%s1207 + $0xc8] sm:$0xff]
        %v1234 = vld [vmem:[%s1207 + $0xd0] sm:$0xff]
        %v1235 = vld [vmem:[%s1207 + $0xd8] sm:$0xff]
        %v1236 = vld [vmem:[%s1207 + $0xe0] sm:$0xff]
        %v1237 = vld [vmem:[%s1207 + $0xe8] sm:$0xff]
        %v1238 = vld [vmem:[%s1207 + $0xf0] sm:$0xff]
        %v1239 = vld [vmem:[%s1207 + $0xf8] sm:$0xff]
        %v1240 = vld [vmem:[%s1207 + $0x100] sm:$0xff]
        %v1241 = vld [vmem:[%s1207 + $0x108] sm:$0xff]
        %v1242 = vld [vmem:[%s1207 + $0x110] sm:$0xff]
        %v1243 = vld [vmem:[%s1207 + $0x118] sm:$0xff]
        %v1244 = vld [vmem:[%s1207 + $0x120] sm:$0xff]
        %v1245 = vld [vmem:[%s1207 + $0x128] sm:$0xff]
        %v1246 = vld [vmem:[%s1207 + $0x130] sm:$0xff]
        %v1247 = vld [vmem:[%s1207 + $0x138] sm:$0xff]
        %v1248 = vld [vmem:[%s1207 + $0x140] sm:$0xff]
        %v1249 = vld [vmem:[%s1207 + $0x148] sm:$0xff]
        %v1250 = vld [vmem:[%s1207 + $0x150] sm:$0xff]
        %v1251 = vld [vmem:[%s1207 + $0x158] sm:$0xff]
        %v1252 = vld [vmem:[%s1207 + $0x160] sm:$0xff]
        %v1253 = vld [vmem:[%s1207 + $0x168] sm:$0xff]
        %v1254 = vld [vmem:[%s1207 + $0x170] sm:$0xff]
        %v1255 = vld [vmem:[%s1207 + $0x178] sm:$0xff]
        %v1256 = vld [vmem:[%s1207 + $0x180] sm:$0xff]
        %v1257 = vld [vmem:[%s1207 + $0x188] sm:$0xff]
        %v1258 = vld [vmem:[%s1207 + $0x190] sm:$0xff]
        %v1259 = vld [vmem:[%s1207 + $0x198] sm:$0xff]
        %v1260 = vld [vmem:[%s1207 + $0x1a0] sm:$0xff]
        %v1261 = vld [vmem:[%s1207 + $0x1a8] sm:$0xff]
        %v1262 = vld [vmem:[%s1207 + $0x1b0] sm:$0xff]
        %v1263 = vld [vmem:[%s1207 + $0x1b8] sm:$0xff]
        %v1264 = vld [vmem:[%s1207 + $0x1c0] sm:$0xff]
        %v1265 = vld [vmem:[%s1207 + $0x1c8] sm:$0xff]
        %v1266 = vld [vmem:[%s1207 + $0x1d0] sm:$0xff]
        %v1267 = vld [vmem:[%s1207 + $0x1d8] sm:$0xff]
        %v1268 = vld [vmem:[%s1207 + $0x1e0] sm:$0xff]
        %v1269 = vld [vmem:[%s1207 + $0x1e8] sm:$0xff]
        %v1270 = vld [vmem:[%s1207 + $0x1f0] sm:$0xff]
        %v1271 = vld [vmem:[%s1207 + $0x1f8] sm:$0xff]
        %1272 = vmatprep.subr.mxu0 %v1209
        %1273 = vmatpush1.msra.mxu0 %v1208
        %1274 = vmatprep.subr.mxu0 %v1211
        %1275 = vmatpush1.msra.mxu0 %v1210
        %1276 = vmatprep.subr.mxu0 %v1213
        %1277 = vmatpush1.msra.mxu0 %v1212
        %1278 = vmatprep.subr.mxu0 %v1215
        %1279 = vmatpush1.msra.mxu0 %v1214
        %1280 = vmatprep.subr.mxu0 %v1217
        %1281 = vmatpush1.msra.mxu0 %v1216
        %1282 = vmatprep.subr.mxu0 %v1219
        %1283 = vmatpush1.msra.mxu0 %v1218
        %1284 = vmatprep.subr.mxu0 %v1221
        %1285 = vmatpush1.msra.mxu0 %v1220
        %1286 = vmatprep.subr.mxu0 %v1223
        %1287 = vmatpush1.msra.mxu0 %v1222
        %1288 = vmatprep.subr.mxu0 %v1225
        %1289 = vmatpush1.msra.mxu0 %v1224
        %1290 = vmatprep.subr.mxu0 %v1227
        %1291 = vmatpush1.msra.mxu0 %v1226
        %1292 = vmatprep.subr.mxu0 %v1229
        %1293 = vmatpush1.msra.mxu0 %v1228
        %1294 = vmatprep.subr.mxu0 %v1231
        %1295 = vmatpush1.msra.mxu0 %v1230
        %1296 = vmatprep.subr.mxu0 %v1233
        %1297 = vmatpush1.msra.mxu0 %v1232
        %1298 = vmatprep.subr.mxu0 %v1235
        %1299 = vmatpush1.msra.mxu0 %v1234
        %1300 = vmatprep.subr.mxu0 %v1237
        %1301 = vmatpush1.msra.mxu0 %v1236
        %1302 = vmatprep.subr.mxu0 %v1239
        %1303 = vmatpush1.msra.mxu0 %v1238
        %1304 = vmatprep.subr.mxu0 %v1241
        %1305 = vmatpush1.msra.mxu0 %v1240
        %1306 = vmatprep.subr.mxu0 %v1243
        %1307 = vmatpush1.msra.mxu0 %v1242
        %1308 = vmatprep.subr.mxu0 %v1245
        %1309 = vmatpush1.msra.mxu0 %v1244
        %1310 = vmatprep.subr.mxu0 %v1247
        %1311 = vmatpush1.msra.mxu0 %v1246
        %1312 = vmatprep.subr.mxu0 %v1249
        %1313 = vmatpush1.msra.mxu0 %v1248
        %1314 = vmatprep.subr.mxu0 %v1251
        %1315 = vmatpush1.msra.mxu0 %v1250
        %1316 = vmatprep.subr.mxu0 %v1253
        %1317 = vmatpush1.msra.mxu0 %v1252
        %1318 = vmatprep.subr.mxu0 %v1255
        %1319 = vmatpush1.msra.mxu0 %v1254
        %1320 = vmatprep.subr.mxu0 %v1257
        %1321 = vmatpush1.msra.mxu0 %v1256
        %1322 = vmatprep.subr.mxu0 %v1259
        %1323 = vmatpush1.msra.mxu0 %v1258
        %1324 = vmatprep.subr.mxu0 %v1261
        %1325 = vmatpush1.msra.mxu0 %v1260
        %1326 = vmatprep.subr.mxu0 %v1263
        %1327 = vmatpush1.msra.mxu0 %v1262
        %1328 = vmatprep.subr.mxu0 %v1265
        %1329 = vmatpush1.msra.mxu0 %v1264
        %1330 = vmatprep.subr.mxu0 %v1267
        %1331 = vmatpush1.msra.mxu0 %v1266
        %1332 = vmatprep.subr.mxu0 %v1269
        %1333 = vmatpush1.msra.mxu0 %v1268
        %1334 = vmatprep.subr.mxu0 %v1271
        %1335 = vmatpush1.msra.mxu0 %v1270
        %1336 = vmatprep.mubr.f32.mxu0 %v1199
        %1337 = vmatmul.mubr.f32.gmra.mrb[0].mxu0 %v1197
        %v1338 = vpop.f32.mrb[0].mxu0
        %v1339 = vadd.f32 0.0, %v1338
        %v1340 = vpop.f32.mrb[0].mxu0
        %v1341 = vadd.f32 0.0, %v1340
        %1342 = vmatprep.mubr.f32.mxu0 %v1205
        %1343 = vmatmul.mubr.f32.gmra.mrb[0].mxu0 %v1203
        %v1344 = vpop.f32.mrb[0].mxu0
        %v1345 = vadd.f32 0.0, %v1344
        %v1346 = vpop.f32.mrb[0].mxu0
        %v1347 = vadd.f32 0.0, %v1346
        %1348 = vdwg.mxu0
        %1349 = vmatprep.subr.mxu0 %v1067
        %1350 = vmatpush1.msra.mxu0 %v1066
        %1351 = vmatprep.subr.mxu0 %v1069
        %1352 = vmatpush1.msra.mxu0 %v1068
        %1353 = vmatprep.subr.mxu0 %v1071
        %1354 = vmatpush1.msra.mxu0 %v1070
        %1355 = vmatprep.subr.mxu0 %v1073
        %1356 = vmatpush1.msra.mxu0 %v1072
        %1357 = vmatprep.subr.mxu0 %v1075
        %1358 = vmatpush1.msra.mxu0 %v1074
        %1359 = vmatprep.subr.mxu0 %v1077
        %1360 = vmatpush1.msra.mxu0 %v1076
        %1361 = vmatprep.subr.mxu0 %v1079
        %1362 = vmatpush1.msra.mxu0 %v1078
        %1363 = vmatprep.subr.mxu0 %v1081
        %1364 = vmatpush1.msra.mxu0 %v1080
        %1365 = vmatprep.subr.mxu0 %v1083
        %1366 = vmatpush1.msra.mxu0 %v1082
        %1367 = vmatprep.subr.mxu0 %v1085
        %1368 = vmatpush1.msra.mxu0 %v1084
        %1369 = vmatprep.subr.mxu0 %v1087
        %1370 = vmatpush1.msra.mxu0 %v1086
        %1371 = vmatprep.subr.mxu0 %v1089
        %1372 = vmatpush1.msra.mxu0 %v1088
        %1373 = vmatprep.subr.mxu0 %v1091
        %1374 = vmatpush1.msra.mxu0 %v1090
        %1375 = vmatprep.subr.mxu0 %v1093
        %1376 = vmatpush1.msra.mxu0 %v1092
        %1377 = vmatprep.subr.mxu0 %v1095
        %1378 = vmatpush1.msra.mxu0 %v1094
        %1379 = vmatprep.subr.mxu0 %v1097
        %1380 = vmatpush1.msra.mxu0 %v1096
        %1381 = vmatprep.subr.mxu0 %v1099
        %1382 = vmatpush1.msra.mxu0 %v1098
        %1383 = vmatprep.subr.mxu0 %v1101
        %1384 = vmatpush1.msra.mxu0 %v1100
        %1385 = vmatprep.subr.mxu0 %v1103
        %1386 = vmatpush1.msra.mxu0 %v1102
        %1387 = vmatprep.subr.mxu0 %v1105
        %1388 = vmatpush1.msra.mxu0 %v1104
        %1389 = vmatprep.subr.mxu0 %v1107
        %1390 = vmatpush1.msra.mxu0 %v1106
        %1391 = vmatprep.subr.mxu0 %v1109
        %1392 = vmatpush1.msra.mxu0 %v1108
        %1393 = vmatprep.subr.mxu0 %v1111
        %1394 = vmatpush1.msra.mxu0 %v1110
        %1395 = vmatprep.subr.mxu0 %v1113
        %1396 = vmatpush1.msra.mxu0 %v1112
        %1397 = vmatprep.subr.mxu0 %v1115
        %1398 = vmatpush1.msra.mxu0 %v1114
        %1399 = vmatprep.subr.mxu0 %v1117
        %1400 = vmatpush1.msra.mxu0 %v1116
        %1401 = vmatprep.subr.mxu0 %v1119
        %1402 = vmatpush1.msra.mxu0 %v1118
        %1403 = vmatprep.subr.mxu0 %v1121
        %1404 = vmatpush1.msra.mxu0 %v1120
        %1405 = vmatprep.subr.mxu0 %v1123
        %1406 = vmatpush1.msra.mxu0 %v1122
        %1407 = vmatprep.subr.mxu0 %v1125
        %1408 = vmatpush1.msra.mxu0 %v1124
        %1409 = vmatprep.subr.mxu0 %v1127
        %1410 = vmatpush1.msra.mxu0 %v1126
        %1411 = vmatprep.subr.mxu0 %v1129
        %1412 = vmatpush1.msra.mxu0 %v1128
        %1413 = vmatprep.mubr.f32.mxu0 %v1058
        %1414 = vmatmul.mubr.f32.gmra.mrb[0].mxu0 %v1056
        %v1415 = vpop.f32.mrb[0].mxu0
        %v1416 = vadd.f32 %v1339, %v1415
        %v1417 = vpop.f32.mrb[0].mxu0
        %v1418 = vadd.f32 %v1341, %v1417
        %1419 = vmatprep.mubr.f32.mxu0 %v1064
        %1420 = vmatmul.mubr.f32.gmra.mrb[0].mxu0 %v1062
        %v1421 = vpop.f32.mrb[0].mxu0
        %v1422 = vadd.f32 %v1345, %v1421
        %v1423 = vpop.f32.mrb[0].mxu0
        %v1424 = vadd.f32 %v1347, %v1423
        %1425 = vdwg.mxu0
        %1426 = vmatprep.subr.mxu0 %v986
        %1427 = vmatpush1.msra.mxu0 %v985
        %1428 = vmatprep.subr.mxu0 %v988
        %1429 = vmatpush1.msra.mxu0 %v987
        %1430 = vmatprep.subr.mxu0 0.0
        %1431 = vmatpush1.msra.mxu0 0.0
        %1432 = vmatprep.subr.mxu0 0.0
        %1433 = vmatpush1.msra.mxu0 0.0
        %1434 = vmatprep.subr.mxu0 0.0
        %1435 = vmatpush1.msra.mxu0 0.0
        %1436 = vmatprep.subr.mxu0 0.0
        %1437 = vmatpush1.msra.mxu0 0.0
        %1438 = vmatprep.subr.mxu0 0.0
        %1439 = vmatpush1.msra.mxu0 0.0
        %1440 = vmatprep.subr.mxu0 0.0
        %1441 = vmatpush1.msra.mxu0 0.0
        %1442 = vmatprep.subr.mxu0 0.0
        %1443 = vmatpush1.msra.mxu0 0.0
        %1444 = vmatprep.subr.mxu0 0.0
        %1445 = vmatpush1.msra.mxu0 0.0
        %1446 = vmatprep.subr.mxu0 0.0
        %1447 = vmatpush1.msra.mxu0 0.0
        %1448 = vmatprep.subr.mxu0 0.0
        %1449 = vmatpush1.msra.mxu0 0.0
        %1450 = vmatprep.subr.mxu0 0.0
        %1451 = vmatpush1.msra.mxu0 0.0
        %1452 = vmatprep.subr.mxu0 0.0
        %1453 = vmatpush1.msra.mxu0 0.0
        %1454 = vmatprep.subr.mxu0 0.0
        %1455 = vmatpush1.msra.mxu0 0.0
        %1456 = vmatprep.subr.mxu0 0.0
        %1457 = vmatpush1.msra.mxu0 0.0
        %1458 = vmatprep.subr.mxu0 0.0
        %1459 = vmatpush1.msra.mxu0 0.0
        %1460 = vmatprep.subr.mxu0 0.0
        %1461 = vmatpush1.msra.mxu0 0.0
        %1462 = vmatprep.subr.mxu0 0.0
        %1463 = vmatpush1.msra.mxu0 0.0
        %1464 = vmatprep.subr.mxu0 0.0
        %1465 = vmatpush1.msra.mxu0 0.0
        %1466 = vmatprep.subr.mxu0 0.0
        %1467 = vmatpush1.msra.mxu0 0.0
        %1468 = vmatprep.subr.mxu0 0.0
        %1469 = vmatpush1.msra.mxu0 0.0
        %1470 = vmatprep.subr.mxu0 0.0
        %1471 = vmatpush1.msra.mxu0 0.0
        %1472 = vmatprep.subr.mxu0 0.0
        %1473 = vmatpush1.msra.mxu0 0.0
        %1474 = vmatprep.subr.mxu0 0.0
        %1475 = vmatpush1.msra.mxu0 0.0
        %1476 = vmatprep.subr.mxu0 0.0
        %1477 = vmatpush1.msra.mxu0 0.0
        %1478 = vmatprep.subr.mxu0 0.0
        %1479 = vmatpush1.msra.mxu0 0.0
        %1480 = vmatprep.subr.mxu0 0.0
        %1481 = vmatpush1.msra.mxu0 0.0
        %1482 = vmatprep.subr.mxu0 0.0
        %1483 = vmatpush1.msra.mxu0 0.0
        %1484 = vmatprep.subr.mxu0 0.0
        %1485 = vmatpush1.msra.mxu0 0.0
        %1486 = vmatprep.subr.mxu0 0.0
        %1487 = vmatpush1.msra.mxu0 0.0
        %1488 = vmatprep.subr.mxu0 0.0
        %1489 = vmatpush1.msra.mxu0 0.0
        %1490 = vmatprep.mubr.f32.mxu0 0.0
        %1491 = vmatmul.mubr.f32.gmra.mrb[0].mxu0 %v801
        %v1492 = vpop.f32.mrb[0].mxu0
        %v1493 = vadd.f32 0.0, %v1492
        %v1494 = vpop.f32.mrb[0].mxu0
        %v1495 = vadd.f32 0.0, %v1494
        %1496 = vmatprep.mubr.f32.mxu0 0.0
        %1497 = vmatmul.mubr.f32.gmra.mrb[0].mxu0 %v804
        %v1498 = vpop.f32.mrb[0].mxu0
        %v1499 = vadd.f32 0.0, %v1498
        %v1500 = vpop.f32.mrb[0].mxu0
        %v1501 = vadd.f32 0.0, %v1500
        %1502 = vdwg.mxu0
        %s1503 = scalar_lea.vmem [#allocation8], 1024
        %v1504 = vld [vmem:[%s1503] sm:$0xff]
        %v1505 = vld [vmem:[%s1503 + $0x8] sm:$0xff]
        %v1506 = vld [vmem:[%s1503 + $0x10] sm:$0xff]
        %v1507 = vld [vmem:[%s1503 + $0x18] sm:$0xff]
        %v1508 = vld [vmem:[%s1503 + $0x20] sm:$0xff]
        %v1509 = vld [vmem:[%s1503 + $0x28] sm:$0xff]
        %v1510 = vld [vmem:[%s1503 + $0x30] sm:$0xff]
        %v1511 = vld [vmem:[%s1503 + $0x38] sm:$0xff]
        %v1512 = vld [vmem:[%s1503 + $0x40] sm:$0xff]
        %v1513 = vld [vmem:[%s1503 + $0x48] sm:$0xff]
        %v1514 = vld [vmem:[%s1503 + $0x50] sm:$0xff]
        %v1515 = vld [vmem:[%s1503 + $0x58] sm:$0xff]
        %v1516 = vld [vmem:[%s1503 + $0x60] sm:$0xff]
        %v1517 = vld [vmem:[%s1503 + $0x68] sm:$0xff]
        %v1518 = vld [vmem:[%s1503 + $0x70] sm:$0xff]
        %v1519 = vld [vmem:[%s1503 + $0x78] sm:$0xff]
        %v1520 = vld [vmem:[%s1503 + $0x80] sm:$0xff]
        %v1521 = vld [vmem:[%s1503 + $0x88] sm:$0xff]
        %v1522 = vld [vmem:[%s1503 + $0x90] sm:$0xff]
        %v1523 = vld [vmem:[%s1503 + $0x98] sm:$0xff]
        %v1524 = vld [vmem:[%s1503 + $0xa0] sm:$0xff]
        %v1525 = vld [vmem:[%s1503 + $0xa8] sm:$0xff]
        %v1526 = vld [vmem:[%s1503 + $0xb0] sm:$0xff]
        %v1527 = vld [vmem:[%s1503 + $0xb8] sm:$0xff]
        %v1528 = vld [vmem:[%s1503 + $0xc0] sm:$0xff]
        %v1529 = vld [vmem:[%s1503 + $0xc8] sm:$0xff]
        %v1530 = vld [vmem:[%s1503 + $0xd0] sm:$0xff]
        %v1531 = vld [vmem:[%s1503 + $0xd8] sm:$0xff]
        %v1532 = vld [vmem:[%s1503 + $0xe0] sm:$0xff]
        %v1533 = vld [vmem:[%s1503 + $0xe8] sm:$0xff]
        %v1534 = vld [vmem:[%s1503 + $0xf0] sm:$0xff]
        %v1535 = vld [vmem:[%s1503 + $0xf8] sm:$0xff]
        %v1536 = vld [vmem:[%s1503 + $0x100] sm:$0xff]
        %v1537 = vld [vmem:[%s1503 + $0x108] sm:$0xff]
        %v1538 = vld [vmem:[%s1503 + $0x110] sm:$0xff]
        %v1539 = vld [vmem:[%s1503 + $0x118] sm:$0xff]
        %v1540 = vld [vmem:[%s1503 + $0x120] sm:$0xff]
        %v1541 = vld [vmem:[%s1503 + $0x128] sm:$0xff]
        %v1542 = vld [vmem:[%s1503 + $0x130] sm:$0xff]
        %v1543 = vld [vmem:[%s1503 + $0x138] sm:$0xff]
        %v1544 = vld [vmem:[%s1503 + $0x140] sm:$0xff]
        %v1545 = vld [vmem:[%s1503 + $0x148] sm:$0xff]
        %v1546 = vld [vmem:[%s1503 + $0x150] sm:$0xff]
        %v1547 = vld [vmem:[%s1503 + $0x158] sm:$0xff]
        %v1548 = vld [vmem:[%s1503 + $0x160] sm:$0xff]
        %v1549 = vld [vmem:[%s1503 + $0x168] sm:$0xff]
        %v1550 = vld [vmem:[%s1503 + $0x170] sm:$0xff]
        %v1551 = vld [vmem:[%s1503 + $0x178] sm:$0xff]
        %v1552 = vld [vmem:[%s1503 + $0x180] sm:$0xff]
        %v1553 = vld [vmem:[%s1503 + $0x188] sm:$0xff]
        %v1554 = vld [vmem:[%s1503 + $0x190] sm:$0xff]
        %v1555 = vld [vmem:[%s1503 + $0x198] sm:$0xff]
        %v1556 = vld [vmem:[%s1503 + $0x1a0] sm:$0xff]
        %v1557 = vld [vmem:[%s1503 + $0x1a8] sm:$0xff]
        %v1558 = vld [vmem:[%s1503 + $0x1b0] sm:$0xff]
        %v1559 = vld [vmem:[%s1503 + $0x1b8] sm:$0xff]
        %v1560 = vld [vmem:[%s1503 + $0x1c0] sm:$0xff]
        %v1561 = vld [vmem:[%s1503 + $0x1c8] sm:$0xff]
        %v1562 = vld [vmem:[%s1503 + $0x1d0] sm:$0xff]
        %v1563 = vld [vmem:[%s1503 + $0x1d8] sm:$0xff]
        %v1564 = vld [vmem:[%s1503 + $0x1e0] sm:$0xff]
        %v1565 = vld [vmem:[%s1503 + $0x1e8] sm:$0xff]
        %v1566 = vld [vmem:[%s1503 + $0x1f0] sm:$0xff]
        %v1567 = vld [vmem:[%s1503 + $0x1f8] sm:$0xff]
        %1568 = vmatprep.subr.mxu0 %v1505
        %1569 = vmatpush1.msra.mxu0 %v1504
        %1570 = vmatprep.subr.mxu0 %v1507
        %1571 = vmatpush1.msra.mxu0 %v1506
        %1572 = vmatprep.subr.mxu0 %v1509
        %1573 = vmatpush1.msra.mxu0 %v1508
        %1574 = vmatprep.subr.mxu0 %v1511
        %1575 = vmatpush1.msra.mxu0 %v1510
        %1576 = vmatprep.subr.mxu0 %v1513
        %1577 = vmatpush1.msra.mxu0 %v1512
        %1578 = vmatprep.subr.mxu0 %v1515
        %1579 = vmatpush1.msra.mxu0 %v1514
        %1580 = vmatprep.subr.mxu0 %v1517
        %1581 = vmatpush1.msra.mxu0 %v1516
        %1582 = vmatprep.subr.mxu0 %v1519
        %1583 = vmatpush1.msra.mxu0 %v1518
        %1584 = vmatprep.subr.mxu0 %v1521
        %1585 = vmatpush1.msra.mxu0 %v1520
        %1586 = vmatprep.subr.mxu0 %v1523
        %1587 = vmatpush1.msra.mxu0 %v1522
        %1588 = vmatprep.subr.mxu0 %v1525
        %1589 = vmatpush1.msra.mxu0 %v1524
        %1590 = vmatprep.subr.mxu0 %v1527
        %1591 = vmatpush1.msra.mxu0 %v1526
        %1592 = vmatprep.subr.mxu0 %v1529
        %1593 = vmatpush1.msra.mxu0 %v1528
        %1594 = vmatprep.subr.mxu0 %v1531
        %1595 = vmatpush1.msra.mxu0 %v1530
        %1596 = vmatprep.subr.mxu0 %v1533
        %1597 = vmatpush1.msra.mxu0 %v1532
        %1598 = vmatprep.subr.mxu0 %v1535
        %1599 = vmatpush1.msra.mxu0 %v1534
        %1600 = vmatprep.subr.mxu0 %v1537
        %1601 = vmatpush1.msra.mxu0 %v1536
        %1602 = vmatprep.subr.mxu0 %v1539
        %1603 = vmatpush1.msra.mxu0 %v1538
        %1604 = vmatprep.subr.mxu0 %v1541
        %1605 = vmatpush1.msra.mxu0 %v1540
        %1606 = vmatprep.subr.mxu0 %v1543
        %1607 = vmatpush1.msra.mxu0 %v1542
        %1608 = vmatprep.subr.mxu0 %v1545
        %1609 = vmatpush1.msra.mxu0 %v1544
        %1610 = vmatprep.subr.mxu0 %v1547
        %1611 = vmatpush1.msra.mxu0 %v1546
        %1612 = vmatprep.subr.mxu0 %v1549
        %1613 = vmatpush1.msra.mxu0 %v1548
        %1614 = vmatprep.subr.mxu0 %v1551
        %1615 = vmatpush1.msra.mxu0 %v1550
        %1616 = vmatprep.subr.mxu0 %v1553
        %1617 = vmatpush1.msra.mxu0 %v1552
        %1618 = vmatprep.subr.mxu0 %v1555
        %1619 = vmatpush1.msra.mxu0 %v1554
        %1620 = vmatprep.subr.mxu0 %v1557
        %1621 = vmatpush1.msra.mxu0 %v1556
        %1622 = vmatprep.subr.mxu0 %v1559
        %1623 = vmatpush1.msra.mxu0 %v1558
        %1624 = vmatprep.subr.mxu0 %v1561
        %1625 = vmatpush1.msra.mxu0 %v1560
        %1626 = vmatprep.subr.mxu0 %v1563
        %1627 = vmatpush1.msra.mxu0 %v1562
        %1628 = vmatprep.subr.mxu0 %v1565
        %1629 = vmatpush1.msra.mxu0 %v1564
        %1630 = vmatprep.subr.mxu0 %v1567
        %1631 = vmatpush1.msra.mxu0 %v1566
        %1632 = vmatprep.mubr.f32.mxu0 %v1495
        %1633 = vmatmul.mubr.f32.gmra.mrb[0].mxu0 %v1493
        %v1634 = vpop.f32.mrb[0].mxu0
        %v1635 = vadd.f32 0.0, %v1634
        %v1636 = vpop.f32.mrb[0].mxu0
        %v1637 = vadd.f32 0.0, %v1636
        %1638 = vmatprep.mubr.f32.mxu0 %v1501
        %1639 = vmatmul.mubr.f32.gmra.mrb[0].mxu0 %v1499
        %v1640 = vpop.f32.mrb[0].mxu0
        %v1641 = vadd.f32 0.0, %v1640
        %v1642 = vpop.f32.mrb[0].mxu0
        %v1643 = vadd.f32 0.0, %v1642
        %1644 = vdwg.mxu0
        %v1645 = vadd.f32 %v1416, %v1635
        %v1646 = vadd.f32 %v1418, %v1637
        %v1647 = vadd.f32 %v1422, %v1641
        %v1648 = vadd.f32 %v1424, %v1643
        %v1649 = vld [vmem:[%s5] sm:$0x3]
        %v1651 = vlaneseq
        %v1652 = vshrl.u32 %v1651, 7
        %v1653 = vsub.s32 0, %v1652
        %v1654 = vrot.slane %v1649, %v1653
        %v1655 = vlaneseq
        %v1656 = vshrl.u32 %v1655, 7
        %v1657 = vsub.s32 1, %v1656
        %v1658 = vrot.slane %v1649, %v1657
        %v1661 = vadd.f32 %v1645, %v1654
        %v1662 = vadd.f32 %v1646, %v1658
        %v1663 = vadd.f32 %v1647, %v1654
        %v1664 = vadd.f32 %v1648, %v1658
        %1665 = vmatprep.subr.mxu0 %v1662
        %1666 = vmatpush1.msra.mxu0 %v1661
        %1667 = vmatprep.subr.mxu0 %v1664
        %1668 = vmatpush1.msra.mxu0 %v1663
        %1669 = vmatprep.subr.mxu0 0.0
        %1670 = vmatpush1.msra.mxu0 0.0
        %1671 = vmatprep.subr.mxu0 0.0
        %1672 = vmatpush1.msra.mxu0 0.0
        %1673 = vmatprep.subr.mxu0 0.0
        %1674 = vmatpush1.msra.mxu0 0.0
        %1675 = vmatprep.subr.mxu0 0.0
        %1676 = vmatpush1.msra.mxu0 0.0
        %1677 = vmatprep.subr.mxu0 0.0
        %1678 = vmatpush1.msra.mxu0 0.0
        %1679 = vmatprep.subr.mxu0 0.0
        %1680 = vmatpush1.msra.mxu0 0.0
        %1681 = vmatprep.subr.mxu0 0.0
        %1682 = vmatpush1.msra.mxu0 0.0
        %1683 = vmatprep.subr.mxu0 0.0
        %1684 = vmatpush1.msra.mxu0 0.0
        %1685 = vmatprep.subr.mxu0 0.0
        %1686 = vmatpush1.msra.mxu0 0.0
        %1687 = vmatprep.subr.mxu0 0.0
        %1688 = vmatpush1.msra.mxu0 0.0
        %1689 = vmatprep.subr.mxu0 0.0
        %1690 = vmatpush1.msra.mxu0 0.0
        %1691 = vmatprep.subr.mxu0 0.0
        %1692 = vmatpush1.msra.mxu0 0.0
        %1693 = vmatprep.subr.mxu0 0.0
        %1694 = vmatpush1.msra.mxu0 0.0
        %1695 = vmatprep.subr.mxu0 0.0
        %1696 = vmatpush1.msra.mxu0 0.0
        %1697 = vmatprep.subr.mxu0 0.0
        %1698 = vmatpush1.msra.mxu0 0.0
        %1699 = vmatprep.subr.mxu0 0.0
        %1700 = vmatpush1.msra.mxu0 0.0
        %1701 = vmatprep.subr.mxu0 0.0
        %1702 = vmatpush1.msra.mxu0 0.0
        %1703 = vmatprep.subr.mxu0 0.0
        %1704 = vmatpush1.msra.mxu0 0.0
        %1705 = vmatprep.subr.mxu0 0.0
        %1706 = vmatpush1.msra.mxu0 0.0
        %1707 = vmatprep.subr.mxu0 0.0
        %1708 = vmatpush1.msra.mxu0 0.0
        %1709 = vmatprep.subr.mxu0 0.0
        %1710 = vmatpush1.msra.mxu0 0.0
        %1711 = vmatprep.subr.mxu0 0.0
        %1712 = vmatpush1.msra.mxu0 0.0
        %1713 = vmatprep.subr.mxu0 0.0
        %1714 = vmatpush1.msra.mxu0 0.0
        %1715 = vmatprep.subr.mxu0 0.0
        %1716 = vmatpush1.msra.mxu0 0.0
        %1717 = vmatprep.subr.mxu0 0.0
        %1718 = vmatpush1.msra.mxu0 0.0
        %1719 = vmatprep.subr.mxu0 0.0
        %1720 = vmatpush1.msra.mxu0 0.0
        %1721 = vmatprep.subr.mxu0 0.0
        %1722 = vmatpush1.msra.mxu0 0.0
        %1723 = vmatprep.subr.mxu0 0.0
        %1724 = vmatpush1.msra.mxu0 0.0
        %1725 = vmatprep.subr.mxu0 0.0
        %1726 = vmatpush1.msra.mxu0 0.0
        %1727 = vmatprep.subr.mxu0 0.0
        %1728 = vmatpush1.msra.mxu0 0.0
        %1729 = vmatprep.mubr.f32.mxu0 0.0
        %1730 = vmatmul.mubr.f32.gmra.mrb[0].mxu0 %v458
        %v1731 = vpop.f32.mrb[0].mxu0
        %v1732 = vadd.f32 0.0, %v1731
        %v1733 = vpop.f32.mrb[0].mxu0
        %v1734 = vadd.f32 0.0, %v1733
        %1735 = vmatprep.mubr.f32.mxu0 0.0
        %1736 = vmatmul.mubr.f32.gmra.mrb[0].mxu0 %v461
        %v1737 = vpop.f32.mrb[0].mxu0
        %v1738 = vadd.f32 0.0, %v1737
        %v1739 = vpop.f32.mrb[0].mxu0
        %v1740 = vadd.f32 0.0, %v1739
        %1741 = vdwg.mxu0
        %v1742 = vld [vmem:[#allocation10] sm:$0xff]
        %v1743 = vld [vmem:[#allocation10 + $0x8] sm:$0xff]
        %v1744 = vld [vmem:[#allocation10 + $0x10] sm:$0xff]
        %v1745 = vld [vmem:[#allocation10 + $0x18] sm:$0xff]
        %v1746 = vld [vmem:[#allocation10 + $0x20] sm:$0xff]
        %v1747 = vld [vmem:[#allocation10 + $0x28] sm:$0xff]
        %v1748 = vld [vmem:[#allocation10 + $0x30] sm:$0xff]
        %v1749 = vld [vmem:[#allocation10 + $0x38] sm:$0xff]
        %v1750 = vld [vmem:[#allocation10 + $0x40] sm:$0xff]
        %v1751 = vld [vmem:[#allocation10 + $0x48] sm:$0xff]
        %v1752 = vld [vmem:[#allocation10 + $0x50] sm:$0xff]
        %v1753 = vld [vmem:[#allocation10 + $0x58] sm:$0xff]
        %v1754 = vld [vmem:[#allocation10 + $0x60] sm:$0xff]
        %v1755 = vld [vmem:[#allocation10 + $0x68] sm:$0xff]
        %v1756 = vld [vmem:[#allocation10 + $0x70] sm:$0xff]
        %v1757 = vld [vmem:[#allocation10 + $0x78] sm:$0xff]
        %v1758 = vld [vmem:[#allocation10 + $0x80] sm:$0xff]
        %v1759 = vld [vmem:[#allocation10 + $0x88] sm:$0xff]
        %v1760 = vld [vmem:[#allocation10 + $0x90] sm:$0xff]
        %v1761 = vld [vmem:[#allocation10 + $0x98] sm:$0xff]
        %v1762 = vld [vmem:[#allocation10 + $0xa0] sm:$0xff]
        %v1763 = vld [vmem:[#allocation10 + $0xa8] sm:$0xff]
        %v1764 = vld [vmem:[#allocation10 + $0xb0] sm:$0xff]
        %v1765 = vld [vmem:[#allocation10 + $0xb8] sm:$0xff]
        %v1766 = vld [vmem:[#allocation10 + $0xc0] sm:$0xff]
        %v1767 = vld [vmem:[#allocation10 + $0xc8] sm:$0xff]
        %v1768 = vld [vmem:[#allocation10 + $0xd0] sm:$0xff]
        %v1769 = vld [vmem:[#allocation10 + $0xd8] sm:$0xff]
        %v1770 = vld [vmem:[#allocation10 + $0xe0] sm:$0xff]
        %v1771 = vld [vmem:[#allocation10 + $0xe8] sm:$0xff]
        %v1772 = vld [vmem:[#allocation10 + $0xf0] sm:$0xff]
        %v1773 = vld [vmem:[#allocation10 + $0xf8] sm:$0xff]
        %v1774 = vld [vmem:[#allocation10 + $0x100] sm:$0xff]
        %v1775 = vld [vmem:[#allocation10 + $0x108] sm:$0xff]
        %v1776 = vld [vmem:[#allocation10 + $0x110] sm:$0xff]
        %v1777 = vld [vmem:[#allocation10 + $0x118] sm:$0xff]
        %v1778 = vld [vmem:[#allocation10 + $0x120] sm:$0xff]
        %v1779 = vld [vmem:[#allocation10 + $0x128] sm:$0xff]
        %v1780 = vld [vmem:[#allocation10 + $0x130] sm:$0xff]
        %v1781 = vld [vmem:[#allocation10 + $0x138] sm:$0xff]
        %v1782 = vld [vmem:[#allocation10 + $0x140] sm:$0xff]
        %v1783 = vld [vmem:[#allocation10 + $0x148] sm:$0xff]
        %v1784 = vld [vmem:[#allocation10 + $0x150] sm:$0xff]
        %v1785 = vld [vmem:[#allocation10 + $0x158] sm:$0xff]
        %v1786 = vld [vmem:[#allocation10 + $0x160] sm:$0xff]
        %v1787 = vld [vmem:[#allocation10 + $0x168] sm:$0xff]
        %v1788 = vld [vmem:[#allocation10 + $0x170] sm:$0xff]
        %v1789 = vld [vmem:[#allocation10 + $0x178] sm:$0xff]
        %v1790 = vld [vmem:[#allocation10 + $0x180] sm:$0xff]
        %v1791 = vld [vmem:[#allocation10 + $0x188] sm:$0xff]
        %v1792 = vld [vmem:[#allocation10 + $0x190] sm:$0xff]
        %v1793 = vld [vmem:[#allocation10 + $0x198] sm:$0xff]
        %v1794 = vld [vmem:[#allocation10 + $0x1a0] sm:$0xff]
        %v1795 = vld [vmem:[#allocation10 + $0x1a8] sm:$0xff]
        %v1796 = vld [vmem:[#allocation10 + $0x1b0] sm:$0xff]
        %v1797 = vld [vmem:[#allocation10 + $0x1b8] sm:$0xff]
        %v1798 = vld [vmem:[#allocation10 + $0x1c0] sm:$0xff]
        %v1799 = vld [vmem:[#allocation10 + $0x1c8] sm:$0xff]
        %v1800 = vld [vmem:[#allocation10 + $0x1d0] sm:$0xff]
        %v1801 = vld [vmem:[#allocation10 + $0x1d8] sm:$0xff]
        %v1802 = vld [vmem:[#allocation10 + $0x1e0] sm:$0xff]
        %v1803 = vld [vmem:[#allocation10 + $0x1e8] sm:$0xff]
        %v1804 = vld [vmem:[#allocation10 + $0x1f0] sm:$0xff]
        %v1805 = vld [vmem:[#allocation10 + $0x1f8] sm:$0xff]
        %1806 = vmatprep.subr.mxu0 %v1662
        %1807 = vmatpush1.msra.mxu0 %v1661
        %1808 = vmatprep.subr.mxu0 %v1664
        %1809 = vmatpush1.msra.mxu0 %v1663
        %1810 = vmatprep.subr.mxu0 0.0
        %1811 = vmatpush1.msra.mxu0 0.0
        %1812 = vmatprep.subr.mxu0 0.0
        %1813 = vmatpush1.msra.mxu0 0.0
        %1814 = vmatprep.subr.mxu0 0.0
        %1815 = vmatpush1.msra.mxu0 0.0
        %1816 = vmatprep.subr.mxu0 0.0
        %1817 = vmatpush1.msra.mxu0 0.0
        %1818 = vmatprep.subr.mxu0 0.0
        %1819 = vmatpush1.msra.mxu0 0.0
        %1820 = vmatprep.subr.mxu0 0.0
        %1821 = vmatpush1.msra.mxu0 0.0
        %1822 = vmatprep.subr.mxu0 0.0
        %1823 = vmatpush1.msra.mxu0 0.0
        %1824 = vmatprep.subr.mxu0 0.0
        %1825 = vmatpush1.msra.mxu0 0.0
        %1826 = vmatprep.subr.mxu0 0.0
        %1827 = vmatpush1.msra.mxu0 0.0
        %1828 = vmatprep.subr.mxu0 0.0
        %1829 = vmatpush1.msra.mxu0 0.0
        %1830 = vmatprep.subr.mxu0 0.0
        %1831 = vmatpush1.msra.mxu0 0.0
        %1832 = vmatprep.subr.mxu0 0.0
        %1833 = vmatpush1.msra.mxu0 0.0
        %1834 = vmatprep.subr.mxu0 0.0
        %1835 = vmatpush1.msra.mxu0 0.0
        %1836 = vmatprep.subr.mxu0 0.0
        %1837 = vmatpush1.msra.mxu0 0.0
        %1838 = vmatprep.subr.mxu0 0.0
        %1839 = vmatpush1.msra.mxu0 0.0
        %1840 = vmatprep.subr.mxu0 0.0
        %1841 = vmatpush1.msra.mxu0 0.0
        %1842 = vmatprep.subr.mxu0 0.0
        %1843 = vmatpush1.msra.mxu0 0.0
        %1844 = vmatprep.subr.mxu0 0.0
        %1845 = vmatpush1.msra.mxu0 0.0
        %1846 = vmatprep.subr.mxu0 0.0
        %1847 = vmatpush1.msra.mxu0 0.0
        %1848 = vmatprep.subr.mxu0 0.0
        %1849 = vmatpush1.msra.mxu0 0.0
        %1850 = vmatprep.subr.mxu0 0.0
        %1851 = vmatpush1.msra.mxu0 0.0
        %1852 = vmatprep.subr.mxu0 0.0
        %1853 = vmatpush1.msra.mxu0 0.0
        %1854 = vmatprep.subr.mxu0 0.0
        %1855 = vmatpush1.msra.mxu0 0.0
        %1856 = vmatprep.subr.mxu0 0.0
        %1857 = vmatpush1.msra.mxu0 0.0
        %1858 = vmatprep.subr.mxu0 0.0
        %1859 = vmatpush1.msra.mxu0 0.0
        %1860 = vmatprep.subr.mxu0 0.0
        %1861 = vmatpush1.msra.mxu0 0.0
        %1862 = vmatprep.subr.mxu0 0.0
        %1863 = vmatpush1.msra.mxu0 0.0
        %1864 = vmatprep.subr.mxu0 0.0
        %1865 = vmatpush1.msra.mxu0 0.0
        %1866 = vmatprep.subr.mxu0 0.0
        %1867 = vmatpush1.msra.mxu0 0.0
        %1868 = vmatprep.subr.mxu0 0.0
        %1869 = vmatpush1.msra.mxu0 0.0
        %1870 = vmatprep.mubr.f32.mxu0 0.0
        %1871 = vmatmul.mubr.f32.gmra.mrb[0].mxu0 %v546
        %v1872 = vpop.f32.mrb[0].mxu0
        %v1873 = vadd.f32 0.0, %v1872
        %v1874 = vpop.f32.mrb[0].mxu0
        %v1875 = vadd.f32 0.0, %v1874
        %1876 = vmatprep.mubr.f32.mxu0 0.0
        %1877 = vmatmul.mubr.f32.gmra.mrb[0].mxu0 %v549
        %v1878 = vpop.f32.mrb[0].mxu0
        %v1879 = vadd.f32 0.0, %v1878
        %v1880 = vpop.f32.mrb[0].mxu0
        %v1881 = vadd.f32 0.0, %v1880
        %1882 = vdwg.mxu0
        %s1883 = scalar_lea.vmem [#allocation10], 512
        %v1884 = vld [vmem:[%s1883] sm:$0xff]
        %v1885 = vld [vmem:[%s1883 + $0x8] sm:$0xff]
        %v1886 = vld [vmem:[%s1883 + $0x10] sm:$0xff]
        %v1887 = vld [vmem:[%s1883 + $0x18] sm:$0xff]
        %v1888 = vld [vmem:[%s1883 + $0x20] sm:$0xff]
        %v1889 = vld [vmem:[%s1883 + $0x28] sm:$0xff]
        %v1890 = vld [vmem:[%s1883 + $0x30] sm:$0xff]
        %v1891 = vld [vmem:[%s1883 + $0x38] sm:$0xff]
        %v1892 = vld [vmem:[%s1883 + $0x40] sm:$0xff]
        %v1893 = vld [vmem:[%s1883 + $0x48] sm:$0xff]
        %v1894 = vld [vmem:[%s1883 + $0x50] sm:$0xff]
        %v1895 = vld [vmem:[%s1883 + $0x58] sm:$0xff]
        %v1896 = vld [vmem:[%s1883 + $0x60] sm:$0xff]
        %v1897 = vld [vmem:[%s1883 + $0x68] sm:$0xff]
        %v1898 = vld [vmem:[%s1883 + $0x70] sm:$0xff]
        %v1899 = vld [vmem:[%s1883 + $0x78] sm:$0xff]
        %v1900 = vld [vmem:[%s1883 + $0x80] sm:$0xff]
        %v1901 = vld [vmem:[%s1883 + $0x88] sm:$0xff]
        %v1902 = vld [vmem:[%s1883 + $0x90] sm:$0xff]
        %v1903 = vld [vmem:[%s1883 + $0x98] sm:$0xff]
        %v1904 = vld [vmem:[%s1883 + $0xa0] sm:$0xff]
        %v1905 = vld [vmem:[%s1883 + $0xa8] sm:$0xff]
        %v1906 = vld [vmem:[%s1883 + $0xb0] sm:$0xff]
        %v1907 = vld [vmem:[%s1883 + $0xb8] sm:$0xff]
        %v1908 = vld [vmem:[%s1883 + $0xc0] sm:$0xff]
        %v1909 = vld [vmem:[%s1883 + $0xc8] sm:$0xff]
        %v1910 = vld [vmem:[%s1883 + $0xd0] sm:$0xff]
        %v1911 = vld [vmem:[%s1883 + $0xd8] sm:$0xff]
        %v1912 = vld [vmem:[%s1883 + $0xe0] sm:$0xff]
        %v1913 = vld [vmem:[%s1883 + $0xe8] sm:$0xff]
        %v1914 = vld [vmem:[%s1883 + $0xf0] sm:$0xff]
        %v1915 = vld [vmem:[%s1883 + $0xf8] sm:$0xff]
        %v1916 = vld [vmem:[%s1883 + $0x100] sm:$0xff]
        %v1917 = vld [vmem:[%s1883 + $0x108] sm:$0xff]
        %v1918 = vld [vmem:[%s1883 + $0x110] sm:$0xff]
        %v1919 = vld [vmem:[%s1883 + $0x118] sm:$0xff]
        %v1920 = vld [vmem:[%s1883 + $0x120] sm:$0xff]
        %v1921 = vld [vmem:[%s1883 + $0x128] sm:$0xff]
        %v1922 = vld [vmem:[%s1883 + $0x130] sm:$0xff]
        %v1923 = vld [vmem:[%s1883 + $0x138] sm:$0xff]
        %v1924 = vld [vmem:[%s1883 + $0x140] sm:$0xff]
        %v1925 = vld [vmem:[%s1883 + $0x148] sm:$0xff]
        %v1926 = vld [vmem:[%s1883 + $0x150] sm:$0xff]
        %v1927 = vld [vmem:[%s1883 + $0x158] sm:$0xff]
        %v1928 = vld [vmem:[%s1883 + $0x160] sm:$0xff]
        %v1929 = vld [vmem:[%s1883 + $0x168] sm:$0xff]
        %v1930 = vld [vmem:[%s1883 + $0x170] sm:$0xff]
        %v1931 = vld [vmem:[%s1883 + $0x178] sm:$0xff]
        %v1932 = vld [vmem:[%s1883 + $0x180] sm:$0xff]
        %v1933 = vld [vmem:[%s1883 + $0x188] sm:$0xff]
        %v1934 = vld [vmem:[%s1883 + $0x190] sm:$0xff]
        %v1935 = vld [vmem:[%s1883 + $0x198] sm:$0xff]
        %v1936 = vld [vmem:[%s1883 + $0x1a0] sm:$0xff]
        %v1937 = vld [vmem:[%s1883 + $0x1a8] sm:$0xff]
        %v1938 = vld [vmem:[%s1883 + $0x1b0] sm:$0xff]
        %v1939 = vld [vmem:[%s1883 + $0x1b8] sm:$0xff]
        %v1940 = vld [vmem:[%s1883 + $0x1c0] sm:$0xff]
        %v1941 = vld [vmem:[%s1883 + $0x1c8] sm:$0xff]
        %v1942 = vld [vmem:[%s1883 + $0x1d0] sm:$0xff]
        %v1943 = vld [vmem:[%s1883 + $0x1d8] sm:$0xff]
        %v1944 = vld [vmem:[%s1883 + $0x1e0] sm:$0xff]
        %v1945 = vld [vmem:[%s1883 + $0x1e8] sm:$0xff]
        %v1946 = vld [vmem:[%s1883 + $0x1f0] sm:$0xff]
        %v1947 = vld [vmem:[%s1883 + $0x1f8] sm:$0xff]
        %1948 = vmatprep.subr.mxu0 %v1885
        %1949 = vmatpush1.msra.mxu0 %v1884
        %1950 = vmatprep.subr.mxu0 %v1887
        %1951 = vmatpush1.msra.mxu0 %v1886
        %1952 = vmatprep.subr.mxu0 %v1889
        %1953 = vmatpush1.msra.mxu0 %v1888
        %1954 = vmatprep.subr.mxu0 %v1891
        %1955 = vmatpush1.msra.mxu0 %v1890
        %1956 = vmatprep.subr.mxu0 %v1893
        %1957 = vmatpush1.msra.mxu0 %v1892
        %1958 = vmatprep.subr.mxu0 %v1895
        %1959 = vmatpush1.msra.mxu0 %v1894
        %1960 = vmatprep.subr.mxu0 %v1897
        %1961 = vmatpush1.msra.mxu0 %v1896
        %1962 = vmatprep.subr.mxu0 %v1899
        %1963 = vmatpush1.msra.mxu0 %v1898
        %1964 = vmatprep.subr.mxu0 %v1901
        %1965 = vmatpush1.msra.mxu0 %v1900
        %1966 = vmatprep.subr.mxu0 %v1903
        %1967 = vmatpush1.msra.mxu0 %v1902
        %1968 = vmatprep.subr.mxu0 %v1905
        %1969 = vmatpush1.msra.mxu0 %v1904
        %1970 = vmatprep.subr.mxu0 %v1907
        %1971 = vmatpush1.msra.mxu0 %v1906
        %1972 = vmatprep.subr.mxu0 %v1909
        %1973 = vmatpush1.msra.mxu0 %v1908
        %1974 = vmatprep.subr.mxu0 %v1911
        %1975 = vmatpush1.msra.mxu0 %v1910
        %1976 = vmatprep.subr.mxu0 %v1913
        %1977 = vmatpush1.msra.mxu0 %v1912
        %1978 = vmatprep.subr.mxu0 %v1915
        %1979 = vmatpush1.msra.mxu0 %v1914
        %1980 = vmatprep.subr.mxu0 %v1917
        %1981 = vmatpush1.msra.mxu0 %v1916
        %1982 = vmatprep.subr.mxu0 %v1919
        %1983 = vmatpush1.msra.mxu0 %v1918
        %1984 = vmatprep.subr.mxu0 %v1921
        %1985 = vmatpush1.msra.mxu0 %v1920
        %1986 = vmatprep.subr.mxu0 %v1923
        %1987 = vmatpush1.msra.mxu0 %v1922
        %1988 = vmatprep.subr.mxu0 %v1925
        %1989 = vmatpush1.msra.mxu0 %v1924
        %1990 = vmatprep.subr.mxu0 %v1927
        %1991 = vmatpush1.msra.mxu0 %v1926
        %1992 = vmatprep.subr.mxu0 %v1929
        %1993 = vmatpush1.msra.mxu0 %v1928
        %1994 = vmatprep.subr.mxu0 %v1931
        %1995 = vmatpush1.msra.mxu0 %v1930
        %1996 = vmatprep.subr.mxu0 %v1933
        %1997 = vmatpush1.msra.mxu0 %v1932
        %1998 = vmatprep.subr.mxu0 %v1935
        %1999 = vmatpush1.msra.mxu0 %v1934
        %2000 = vmatprep.subr.mxu0 %v1937
        %2001 = vmatpush1.msra.mxu0 %v1936
        %2002 = vmatprep.subr.mxu0 %v1939
        %2003 = vmatpush1.msra.mxu0 %v1938
        %2004 = vmatprep.subr.mxu0 %v1941
        %2005 = vmatpush1.msra.mxu0 %v1940
        %2006 = vmatprep.subr.mxu0 %v1943
        %2007 = vmatpush1.msra.mxu0 %v1942
        %2008 = vmatprep.subr.mxu0 %v1945
        %2009 = vmatpush1.msra.mxu0 %v1944
        %2010 = vmatprep.subr.mxu0 %v1947
        %2011 = vmatpush1.msra.mxu0 %v1946
        %2012 = vmatprep.mubr.f32.mxu0 %v1875
        %2013 = vmatmul.mubr.f32.gmra.mrb[0].mxu0 %v1873
        %v2014 = vpop.f32.mrb[0].mxu0
        %v2015 = vadd.f32 0.0, %v2014
        %v2016 = vpop.f32.mrb[0].mxu0
        %v2017 = vadd.f32 0.0, %v2016
        %2018 = vmatprep.mubr.f32.mxu0 %v1881
        %2019 = vmatmul.mubr.f32.gmra.mrb[0].mxu0 %v1879
        %v2020 = vpop.f32.mrb[0].mxu0
        %v2021 = vadd.f32 0.0, %v2020
        %v2022 = vpop.f32.mrb[0].mxu0
        %v2023 = vadd.f32 0.0, %v2022
        %2024 = vdwg.mxu0
        %2025 = vmatprep.subr.mxu0 %v1743
        %2026 = vmatpush1.msra.mxu0 %v1742
        %2027 = vmatprep.subr.mxu0 %v1745
        %2028 = vmatpush1.msra.mxu0 %v1744
        %2029 = vmatprep.subr.mxu0 %v1747
        %2030 = vmatpush1.msra.mxu0 %v1746
        %2031 = vmatprep.subr.mxu0 %v1749
        %2032 = vmatpush1.msra.mxu0 %v1748
        %2033 = vmatprep.subr.mxu0 %v1751
        %2034 = vmatpush1.msra.mxu0 %v1750
        %2035 = vmatprep.subr.mxu0 %v1753
        %2036 = vmatpush1.msra.mxu0 %v1752
        %2037 = vmatprep.subr.mxu0 %v1755
        %2038 = vmatpush1.msra.mxu0 %v1754
        %2039 = vmatprep.subr.mxu0 %v1757
        %2040 = vmatpush1.msra.mxu0 %v1756
        %2041 = vmatprep.subr.mxu0 %v1759
        %2042 = vmatpush1.msra.mxu0 %v1758
        %2043 = vmatprep.subr.mxu0 %v1761
        %2044 = vmatpush1.msra.mxu0 %v1760
        %2045 = vmatprep.subr.mxu0 %v1763
        %2046 = vmatpush1.msra.mxu0 %v1762
        %2047 = vmatprep.subr.mxu0 %v1765
        %2048 = vmatpush1.msra.mxu0 %v1764
        %2049 = vmatprep.subr.mxu0 %v1767
        %2050 = vmatpush1.msra.mxu0 %v1766
        %2051 = vmatprep.subr.mxu0 %v1769
        %2052 = vmatpush1.msra.mxu0 %v1768
        %2053 = vmatprep.subr.mxu0 %v1771
        %2054 = vmatpush1.msra.mxu0 %v1770
        %2055 = vmatprep.subr.mxu0 %v1773
        %2056 = vmatpush1.msra.mxu0 %v1772
        %2057 = vmatprep.subr.mxu0 %v1775
        %2058 = vmatpush1.msra.mxu0 %v1774
        %2059 = vmatprep.subr.mxu0 %v1777
        %2060 = vmatpush1.msra.mxu0 %v1776
        %2061 = vmatprep.subr.mxu0 %v1779
        %2062 = vmatpush1.msra.mxu0 %v1778
        %2063 = vmatprep.subr.mxu0 %v1781
        %2064 = vmatpush1.msra.mxu0 %v1780
        %2065 = vmatprep.subr.mxu0 %v1783
        %2066 = vmatpush1.msra.mxu0 %v1782
        %2067 = vmatprep.subr.mxu0 %v1785
        %2068 = vmatpush1.msra.mxu0 %v1784
        %2069 = vmatprep.subr.mxu0 %v1787
        %2070 = vmatpush1.msra.mxu0 %v1786
        %2071 = vmatprep.subr.mxu0 %v1789
        %2072 = vmatpush1.msra.mxu0 %v1788
        %2073 = vmatprep.subr.mxu0 %v1791
        %2074 = vmatpush1.msra.mxu0 %v1790
        %2075 = vmatprep.subr.mxu0 %v1793
        %2076 = vmatpush1.msra.mxu0 %v1792
        %2077 = vmatprep.subr.mxu0 %v1795
        %2078 = vmatpush1.msra.mxu0 %v1794
        %2079 = vmatprep.subr.mxu0 %v1797
        %2080 = vmatpush1.msra.mxu0 %v1796
        %2081 = vmatprep.subr.mxu0 %v1799
        %2082 = vmatpush1.msra.mxu0 %v1798
        %2083 = vmatprep.subr.mxu0 %v1801
        %2084 = vmatpush1.msra.mxu0 %v1800
        %2085 = vmatprep.subr.mxu0 %v1803
        %2086 = vmatpush1.msra.mxu0 %v1802
        %2087 = vmatprep.subr.mxu0 %v1805
        %2088 = vmatpush1.msra.mxu0 %v1804
        %2089 = vmatprep.mubr.f32.mxu0 %v1734
        %2090 = vmatmul.mubr.f32.gmra.mrb[0].mxu0 %v1732
        %v2091 = vpop.f32.mrb[0].mxu0
        %v2092 = vadd.f32 %v2015, %v2091
        %v2093 = vpop.f32.mrb[0].mxu0
        %v2094 = vadd.f32 %v2017, %v2093
        %2095 = vmatprep.mubr.f32.mxu0 %v1740
        %2096 = vmatmul.mubr.f32.gmra.mrb[0].mxu0 %v1738
        %v2097 = vpop.f32.mrb[0].mxu0
        %v2098 = vadd.f32 %v2021, %v2097
        %v2099 = vpop.f32.mrb[0].mxu0
        %v2100 = vadd.f32 %v2023, %v2099
        %2101 = vdwg.mxu0
        %2102 = vmatprep.subr.mxu0 %v1662
        %2103 = vmatpush1.msra.mxu0 %v1661
        %2104 = vmatprep.subr.mxu0 %v1664
        %2105 = vmatpush1.msra.mxu0 %v1663
        %2106 = vmatprep.subr.mxu0 0.0
        %2107 = vmatpush1.msra.mxu0 0.0
        %2108 = vmatprep.subr.mxu0 0.0
        %2109 = vmatpush1.msra.mxu0 0.0
        %2110 = vmatprep.subr.mxu0 0.0
        %2111 = vmatpush1.msra.mxu0 0.0
        %2112 = vmatprep.subr.mxu0 0.0
        %2113 = vmatpush1.msra.mxu0 0.0
        %2114 = vmatprep.subr.mxu0 0.0
        %2115 = vmatpush1.msra.mxu0 0.0
        %2116 = vmatprep.subr.mxu0 0.0
        %2117 = vmatpush1.msra.mxu0 0.0
        %2118 = vmatprep.subr.mxu0 0.0
        %2119 = vmatpush1.msra.mxu0 0.0
        %2120 = vmatprep.subr.mxu0 0.0
        %2121 = vmatpush1.msra.mxu0 0.0
        %2122 = vmatprep.subr.mxu0 0.0
        %2123 = vmatpush1.msra.mxu0 0.0
        %2124 = vmatprep.subr.mxu0 0.0
        %2125 = vmatpush1.msra.mxu0 0.0
        %2126 = vmatprep.subr.mxu0 0.0
        %2127 = vmatpush1.msra.mxu0 0.0
        %2128 = vmatprep.subr.mxu0 0.0
        %2129 = vmatpush1.msra.mxu0 0.0
        %2130 = vmatprep.subr.mxu0 0.0
        %2131 = vmatpush1.msra.mxu0 0.0
        %2132 = vmatprep.subr.mxu0 0.0
        %2133 = vmatpush1.msra.mxu0 0.0
        %2134 = vmatprep.subr.mxu0 0.0
        %2135 = vmatpush1.msra.mxu0 0.0
        %2136 = vmatprep.subr.mxu0 0.0
        %2137 = vmatpush1.msra.mxu0 0.0
        %2138 = vmatprep.subr.mxu0 0.0
        %2139 = vmatpush1.msra.mxu0 0.0
        %2140 = vmatprep.subr.mxu0 0.0
        %2141 = vmatpush1.msra.mxu0 0.0
        %2142 = vmatprep.subr.mxu0 0.0
        %2143 = vmatpush1.msra.mxu0 0.0
        %2144 = vmatprep.subr.mxu0 0.0
        %2145 = vmatpush1.msra.mxu0 0.0
        %2146 = vmatprep.subr.mxu0 0.0
        %2147 = vmatpush1.msra.mxu0 0.0
        %2148 = vmatprep.subr.mxu0 0.0
        %2149 = vmatpush1.msra.mxu0 0.0
        %2150 = vmatprep.subr.mxu0 0.0
        %2151 = vmatpush1.msra.mxu0 0.0
        %2152 = vmatprep.subr.mxu0 0.0
        %2153 = vmatpush1.msra.mxu0 0.0
        %2154 = vmatprep.subr.mxu0 0.0
        %2155 = vmatpush1.msra.mxu0 0.0
        %2156 = vmatprep.subr.mxu0 0.0
        %2157 = vmatpush1.msra.mxu0 0.0
        %2158 = vmatprep.subr.mxu0 0.0
        %2159 = vmatpush1.msra.mxu0 0.0
        %2160 = vmatprep.subr.mxu0 0.0
        %2161 = vmatpush1.msra.mxu0 0.0
        %2162 = vmatprep.subr.mxu0 0.0
        %2163 = vmatpush1.msra.mxu0 0.0
        %2164 = vmatprep.subr.mxu0 0.0
        %2165 = vmatpush1.msra.mxu0 0.0
        %2166 = vmatprep.mubr.f32.mxu0 0.0
        %2167 = vmatmul.mubr.f32.gmra.mrb[0].mxu0 %v801
        %v2168 = vpop.f32.mrb[0].mxu0
        %v2169 = vadd.f32 0.0, %v2168
        %v2170 = vpop.f32.mrb[0].mxu0
        %v2171 = vadd.f32 0.0, %v2170
        %2172 = vmatprep.mubr.f32.mxu0 0.0
        %2173 = vmatmul.mubr.f32.gmra.mrb[0].mxu0 %v804
        %v2174 = vpop.f32.mrb[0].mxu0
        %v2175 = vadd.f32 0.0, %v2174
        %v2176 = vpop.f32.mrb[0].mxu0
        %v2177 = vadd.f32 0.0, %v2176
        %2178 = vdwg.mxu0
        %s2179 = scalar_lea.vmem [#allocation10], 1024
        %v2180 = vld [vmem:[%s2179] sm:$0xff]
        %v2181 = vld [vmem:[%s2179 + $0x8] sm:$0xff]
        %v2182 = vld [vmem:[%s2179 + $0x10] sm:$0xff]
        %v2183 = vld [vmem:[%s2179 + $0x18] sm:$0xff]
        %v2184 = vld [vmem:[%s2179 + $0x20] sm:$0xff]
        %v2185 = vld [vmem:[%s2179 + $0x28] sm:$0xff]
        %v2186 = vld [vmem:[%s2179 + $0x30] sm:$0xff]
        %v2187 = vld [vmem:[%s2179 + $0x38] sm:$0xff]
        %v2188 = vld [vmem:[%s2179 + $0x40] sm:$0xff]
        %v2189 = vld [vmem:[%s2179 + $0x48] sm:$0xff]
        %v2190 = vld [vmem:[%s2179 + $0x50] sm:$0xff]
        %v2191 = vld [vmem:[%s2179 + $0x58] sm:$0xff]
        %v2192 = vld [vmem:[%s2179 + $0x60] sm:$0xff]
        %v2193 = vld [vmem:[%s2179 + $0x68] sm:$0xff]
        %v2194 = vld [vmem:[%s2179 + $0x70] sm:$0xff]
        %v2195 = vld [vmem:[%s2179 + $0x78] sm:$0xff]
        %v2196 = vld [vmem:[%s2179 + $0x80] sm:$0xff]
        %v2197 = vld [vmem:[%s2179 + $0x88] sm:$0xff]
        %v2198 = vld [vmem:[%s2179 + $0x90] sm:$0xff]
        %v2199 = vld [vmem:[%s2179 + $0x98] sm:$0xff]
        %v2200 = vld [vmem:[%s2179 + $0xa0] sm:$0xff]
        %v2201 = vld [vmem:[%s2179 + $0xa8] sm:$0xff]
        %v2202 = vld [vmem:[%s2179 + $0xb0] sm:$0xff]
        %v2203 = vld [vmem:[%s2179 + $0xb8] sm:$0xff]
        %v2204 = vld [vmem:[%s2179 + $0xc0] sm:$0xff]
        %v2205 = vld [vmem:[%s2179 + $0xc8] sm:$0xff]
        %v2206 = vld [vmem:[%s2179 + $0xd0] sm:$0xff]
        %v2207 = vld [vmem:[%s2179 + $0xd8] sm:$0xff]
        %v2208 = vld [vmem:[%s2179 + $0xe0] sm:$0xff]
        %v2209 = vld [vmem:[%s2179 + $0xe8] sm:$0xff]
        %v2210 = vld [vmem:[%s2179 + $0xf0] sm:$0xff]
        %v2211 = vld [vmem:[%s2179 + $0xf8] sm:$0xff]
        %v2212 = vld [vmem:[%s2179 + $0x100] sm:$0xff]
        %v2213 = vld [vmem:[%s2179 + $0x108] sm:$0xff]
        %v2214 = vld [vmem:[%s2179 + $0x110] sm:$0xff]
        %v2215 = vld [vmem:[%s2179 + $0x118] sm:$0xff]
        %v2216 = vld [vmem:[%s2179 + $0x120] sm:$0xff]
        %v2217 = vld [vmem:[%s2179 + $0x128] sm:$0xff]
        %v2218 = vld [vmem:[%s2179 + $0x130] sm:$0xff]
        %v2219 = vld [vmem:[%s2179 + $0x138] sm:$0xff]
        %v2220 = vld [vmem:[%s2179 + $0x140] sm:$0xff]
        %v2221 = vld [vmem:[%s2179 + $0x148] sm:$0xff]
        %v2222 = vld [vmem:[%s2179 + $0x150] sm:$0xff]
        %v2223 = vld [vmem:[%s2179 + $0x158] sm:$0xff]
        %v2224 = vld [vmem:[%s2179 + $0x160] sm:$0xff]
        %v2225 = vld [vmem:[%s2179 + $0x168] sm:$0xff]
        %v2226 = vld [vmem:[%s2179 + $0x170] sm:$0xff]
        %v2227 = vld [vmem:[%s2179 + $0x178] sm:$0xff]
        %v2228 = vld [vmem:[%s2179 + $0x180] sm:$0xff]
        %v2229 = vld [vmem:[%s2179 + $0x188] sm:$0xff]
        %v2230 = vld [vmem:[%s2179 + $0x190] sm:$0xff]
        %v2231 = vld [vmem:[%s2179 + $0x198] sm:$0xff]
        %v2232 = vld [vmem:[%s2179 + $0x1a0] sm:$0xff]
        %v2233 = vld [vmem:[%s2179 + $0x1a8] sm:$0xff]
        %v2234 = vld [vmem:[%s2179 + $0x1b0] sm:$0xff]
        %v2235 = vld [vmem:[%s2179 + $0x1b8] sm:$0xff]
        %v2236 = vld [vmem:[%s2179 + $0x1c0] sm:$0xff]
        %v2237 = vld [vmem:[%s2179 + $0x1c8] sm:$0xff]
        %v2238 = vld [vmem:[%s2179 + $0x1d0] sm:$0xff]
        %v2239 = vld [vmem:[%s2179 + $0x1d8] sm:$0xff]
        %v2240 = vld [vmem:[%s2179 + $0x1e0] sm:$0xff]
        %v2241 = vld [vmem:[%s2179 + $0x1e8] sm:$0xff]
        %v2242 = vld [vmem:[%s2179 + $0x1f0] sm:$0xff]
        %v2243 = vld [vmem:[%s2179 + $0x1f8] sm:$0xff]
        %2244 = vmatprep.subr.mxu0 %v2181
        %2245 = vmatpush1.msra.mxu0 %v2180
        %2246 = vmatprep.subr.mxu0 %v2183
        %2247 = vmatpush1.msra.mxu0 %v2182
        %2248 = vmatprep.subr.mxu0 %v2185
        %2249 = vmatpush1.msra.mxu0 %v2184
        %2250 = vmatprep.subr.mxu0 %v2187
        %2251 = vmatpush1.msra.mxu0 %v2186
        %2252 = vmatprep.subr.mxu0 %v2189
        %2253 = vmatpush1.msra.mxu0 %v2188
        %2254 = vmatprep.subr.mxu0 %v2191
        %2255 = vmatpush1.msra.mxu0 %v2190
        %2256 = vmatprep.subr.mxu0 %v2193
        %2257 = vmatpush1.msra.mxu0 %v2192
        %2258 = vmatprep.subr.mxu0 %v2195
        %2259 = vmatpush1.msra.mxu0 %v2194
        %2260 = vmatprep.subr.mxu0 %v2197
        %2261 = vmatpush1.msra.mxu0 %v2196
        %2262 = vmatprep.subr.mxu0 %v2199
        %2263 = vmatpush1.msra.mxu0 %v2198
        %2264 = vmatprep.subr.mxu0 %v2201
        %2265 = vmatpush1.msra.mxu0 %v2200
        %2266 = vmatprep.subr.mxu0 %v2203
        %2267 = vmatpush1.msra.mxu0 %v2202
        %2268 = vmatprep.subr.mxu0 %v2205
        %2269 = vmatpush1.msra.mxu0 %v2204
        %2270 = vmatprep.subr.mxu0 %v2207
        %2271 = vmatpush1.msra.mxu0 %v2206
        %2272 = vmatprep.subr.mxu0 %v2209
        %2273 = vmatpush1.msra.mxu0 %v2208
        %2274 = vmatprep.subr.mxu0 %v2211
        %2275 = vmatpush1.msra.mxu0 %v2210
        %2276 = vmatprep.subr.mxu0 %v2213
        %2277 = vmatpush1.msra.mxu0 %v2212
        %2278 = vmatprep.subr.mxu0 %v2215
        %2279 = vmatpush1.msra.mxu0 %v2214
        %2280 = vmatprep.subr.mxu0 %v2217
        %2281 = vmatpush1.msra.mxu0 %v2216
        %2282 = vmatprep.subr.mxu0 %v2219
        %2283 = vmatpush1.msra.mxu0 %v2218
        %2284 = vmatprep.subr.mxu0 %v2221
        %2285 = vmatpush1.msra.mxu0 %v2220
        %2286 = vmatprep.subr.mxu0 %v2223
        %2287 = vmatpush1.msra.mxu0 %v2222
        %2288 = vmatprep.subr.mxu0 %v2225
        %2289 = vmatpush1.msra.mxu0 %v2224
        %2290 = vmatprep.subr.mxu0 %v2227
        %2291 = vmatpush1.msra.mxu0 %v2226
        %2292 = vmatprep.subr.mxu0 %v2229
        %2293 = vmatpush1.msra.mxu0 %v2228
        %2294 = vmatprep.subr.mxu0 %v2231
        %2295 = vmatpush1.msra.mxu0 %v2230
        %2296 = vmatprep.subr.mxu0 %v2233
        %2297 = vmatpush1.msra.mxu0 %v2232
        %2298 = vmatprep.subr.mxu0 %v2235
        %2299 = vmatpush1.msra.mxu0 %v2234
        %2300 = vmatprep.subr.mxu0 %v2237
        %2301 = vmatpush1.msra.mxu0 %v2236
        %2302 = vmatprep.subr.mxu0 %v2239
        %2303 = vmatpush1.msra.mxu0 %v2238
        %2304 = vmatprep.subr.mxu0 %v2241
        %2305 = vmatpush1.msra.mxu0 %v2240
        %2306 = vmatprep.subr.mxu0 %v2243
        %2307 = vmatpush1.msra.mxu0 %v2242
        %2308 = vmatprep.mubr.f32.mxu0 %v2171
        %2309 = vmatmul.mubr.f32.gmra.mrb[0].mxu0 %v2169
        %v2310 = vpop.f32.mrb[0].mxu0
        %v2311 = vadd.f32 0.0, %v2310
        %v2312 = vpop.f32.mrb[0].mxu0
        %v2313 = vadd.f32 0.0, %v2312
        %2314 = vmatprep.mubr.f32.mxu0 %v2177
        %2315 = vmatmul.mubr.f32.gmra.mrb[0].mxu0 %v2175
        %v2316 = vpop.f32.mrb[0].mxu0
        %v2317 = vadd.f32 0.0, %v2316
        %v2318 = vpop.f32.mrb[0].mxu0
        %v2319 = vadd.f32 0.0, %v2318
        %2320 = vdwg.mxu0
        %v2321 = vadd.f32 %v2092, %v2311
        %v2322 = vadd.f32 %v2094, %v2313
        %v2323 = vadd.f32 %v2098, %v2317
        %v2324 = vadd.f32 %v2100, %v2319
        %v2325 = vld [vmem:[%s7] sm:$0x3]
        %v2327 = vlaneseq
        %v2328 = vshrl.u32 %v2327, 7
        %v2329 = vsub.s32 0, %v2328
        %v2330 = vrot.slane %v2325, %v2329
        %v2331 = vlaneseq
        %v2332 = vshrl.u32 %v2331, 7
        %v2333 = vsub.s32 1, %v2332
        %v2334 = vrot.slane %v2325, %v2333
        %v2337 = vadd.f32 %v2321, %v2330
        %v2338 = vadd.f32 %v2322, %v2334
        %v2339 = vadd.f32 %v2323, %v2330
        %v2340 = vadd.f32 %v2324, %v2334
        %v2341 = vld [vmem:[%s410] sm:$0xff]
        %v2342 = vld [vmem:[%s410 + $0x8] sm:$0xff]
        %v2343 = vld [vmem:[%s410 + $0x10] sm:$0xff]
        %v2344 = vld [vmem:[%s410 + $0x18] sm:$0xff]
        %v2345 = vadd.f32 %v2337, %v2341
        %v2346 = vadd.f32 %v2338, %v2342
        %v2347 = vadd.f32 %v2339, %v2343
        %v2348 = vadd.f32 %v2340, %v2344
        %2349 = vst [vmem:[%s449] sm:$0xff] %v2345
        %2350 = vst [vmem:[%s449 + $0x8] sm:$0xff] %v2346
        %2351 = vst [vmem:[%s449 + $0x10] sm:$0xff] %v2347
        %2352 = vst [vmem:[%s449 + $0x18] sm:$0xff] %v2348
        %s2353 = sand.u32 %s238, 1
        %s2354 = scalar_lea.sflag [#allocation4], %s2353
        %s2355 = sand.u32 %s238, 1
        %s2356 = smul.addr %s2355, 32
        %s2357 = scalar_lea.vmem [#allocation13], %s2356
        // Predicated region
        $region81: #{tpu_custom_call.1} parent=55 // pred_check
          %p2358 = pneg %p248
        $region82: #{tpu_custom_call.1} parent=55 // pred_check_branch
          %2360 = sbr.rel (%p2358) target = $region84
        $region83: #{tpu_custom_call.1} parent=55 // pred_region
          %s2361 = smul.u32 2, %s31
          %s2363 = ssub.s32 512, 512
          %2364 = vsyncadd %s2354, %s2363
          %s2365 = smul.addr %s2361, 2
          %s2366 = smul.addr %s2365, 128
          %s2367 = scalar_lea.hbm %s9, %s2366
          %s2368 = sshll.u32 %s2357, 4
          %s2369 = int_to_ptr.vmem [resolvable:$true] %s2368
          %2374 = dma.vmem_to_hbm [thread:$0]  %s2369, 512, %s2367, %s2354, 256, 256, 16
        $region84: #{tpu_custom_call.1} parent=55 // pred_fallthru
          _
      $region56: #{tpu_custom_call.1} parent=5 // pred_fallthru
        _
      %p2375 = scmp.le.s32.totalorder 2, %s26
      // Predicated region
      $region85: #{tpu_custom_call.1} parent=5 // pred_check
        %p2376 = pneg %p2375
      $region86: #{tpu_custom_call.1} parent=5 // pred_check_branch
        %2378 = sbr.rel (%p2376) target = $region88
      $region87: #{tpu_custom_call.1} parent=5 // pred_region
        %s2379 = ssub.s32 %s26, 2
        // Predicated region
        $region89: #{tpu_custom_call.1} parent=87 // pred_check
          %p2380 = pneg %p254
        $region90: #{tpu_custom_call.1} parent=87 // pred_check_branch
          %2382 = sbr.rel (%p2380) target = $region92
        $region91: #{tpu_custom_call.1} parent=87 // pred_region
          %s2383 = sand.u32 %s239, 1
          %s2384 = scalar_lea.sflag [#allocation4], %s2383
          %s2385 = sand.u32 %s239, 1
          %s2386 = smul.addr %s2385, 32
          %s2387 = scalar_lea.vmem [#allocation13], %s2386
          %2388 = dma.done %s2384, 512
        $region92: #{tpu_custom_call.1} parent=87 // pred_fallthru
          _
      $region88: #{tpu_custom_call.1} parent=5 // pred_fallthru
        _
    $region6: #{tpu_custom_call.1} parent=1 // loop_footer
      %s30 = sadd.s32 1, %s26
    $region7: #{tpu_custom_call.1} parent=1 // loop_footer_branch
      %25 = sbr.rel target = $region3
    $region8: #{tpu_custom_call.1} parent=1 // loop_exit
      _
    %2389 = vsyncpa [#allocation3], 1
    %s2390 = scalar_lea.sflag [#allocation3], 1
    %2391 = vsyncpa %s2390, 1
    %2392 = vsyncpa [#allocation6], 1
    %2393 = vsyncpa [#allocation9], 1
    %2394 = vsyncpa [#allocation12], 1
    %s2395 = scalar_lea.sflag [#allocation12], 1
    %2396 = vsyncpa %s2395, 1
    %2397 = vsyncpa [#allocation4], 1
    %s2398 = scalar_lea.sflag [#allocation4], 1
    %2399 = vsyncpa %s2398, 1

</llo_original>
